<compile_context>
chip_gen: v7x
topology: tpu7x:2x2x1
jax: 0.10.0
libtpu: 0.0.40
codegen_flags: <defaults>
</compile_context>

<pallas_src>
import functools

import jax
import jax.numpy as jnp
from jax import lax
from jax.experimental import pallas as pl
from jax.experimental.pallas import tpu as pltpu


def _dwconv_kernel(x_ref, h_ref, w_ref, o_ref, *, kw, chunk, n_chunks):
    """One output-row tile of the depthwise 3x3 stride-2 conv.

    x_ref : (KW, 2, th, wc)  main taps  [col-tap j, row parity, out-row, w*C]
    h_ref : (KW, wc)         halo row (row-parity 0 at out-row (t+1)*th)
    w_ref : (KH, KW, wc)     per-tap weights tiled along w_out
    o_ref : (th, wc)         f32 output tile (written exactly once)
    """
    for ci in range(n_chunks):
        lo = ci * chunk
        hi = lo + chunk
        acc = None
        for j in range(kw):
            # Contiguous, lane-aligned chunks straight from the refs.
            p0 = x_ref[j, 0, :, lo:hi].astype(jnp.float32)      # rows r
            p1 = x_ref[j, 1, :, lo:hi].astype(jnp.float32)      # rows r
            halo = h_ref[j:j + 1, lo:hi].astype(jnp.float32)    # (1, chunk)
            p0n = jnp.concatenate([p0[1:], halo], axis=0)       # rows r + 1

            w0 = w_ref[0, j, lo:hi].astype(jnp.float32)
            w1 = w_ref[1, j, lo:hi].astype(jnp.float32)
            w2 = w_ref[2, j, lo:hi].astype(jnp.float32)

            # Serial accumulation chain keeps the live vreg set small.
            t = p0 * w0 if acc is None else acc + p0 * w0
            t = t + p1 * w1
            acc = t + p0n * w2
        o_ref[:, lo:hi] = acc.astype(o_ref.dtype)


def _pick_lane_chunk(wc, max_chunk=1152):
    """Largest multiple of 128 that divides wc and is <= max_chunk."""
    if wc <= max_chunk:
        return wc
    start = max_chunk - (max_chunk % 128)
    for m in range(start, 127, -128):
        if wc % m == 0:
            return m
    return wc  # fallback: single chunk (still correct)


def prepare_depthwise_weights(weight_oihw, w_out):
    """One-time ("parameter load") weight prep: (C,1,KH,KW) -> (KH,KW,w_out*C)."""
    w_kkc = jnp.transpose(weight_oihw[:, 0], (1, 2, 0))   # (KH, KW, C)
    return jnp.tile(w_kkc, (1, 1, w_out))                 # (KH, KW, w_out*C)


@functools.partial(jax.jit, static_argnames=("tile_h",))
def depthwise_conv2d_s2(x_nchw, w_flat, *, tile_h=8):
    """Depthwise conv, kernel 3x3, stride 2, padding 1, groups == C, no bias.

    x_nchw : (1, C, H, W)
    w_flat : (3, 3, w_out*C)  -- from prepare_depthwise_weights
    returns: (1, C, H_out, W_out)
    """
    n, c, h, w = x_nchw.shape
    assert n == 1, "module is defined for batch 1"
    kh, kw, stride, pad = 3, 3, 2, 1
    h_out = (h + 2 * pad - kh) // stride + 1
    w_out = (w + 2 * pad - kw) // stride + 1
    wc = w_out * c

    th = min(tile_h, h_out)
    n_tiles = pl.cdiv(h_out, th)
    h_pad = n_tiles * th                 # output-row space padded to tile grid

    # ---- wrapper-side layout plumbing (fused under jit) --------------------
    x_hwc = jnp.transpose(x_nchw[0], (1, 2, 0))                   # (H, W, C)
    rows_needed = 2 * (h_pad + 1)
    cols_needed = 2 * (w_out + 1)
    x_padded = jnp.pad(
        x_hwc,
        ((pad, rows_needed - h - pad),
         (pad, cols_needed - w - pad),
         (0, 0)))
    # space-to-depth: x5[rb, p, cb, q, ch] == x_padded[2*rb+p, 2*cb+q, ch]
    x5 = x_padded.reshape(h_pad + 1, 2, w_out + 1, 2, c)

    taps = []
    for j in range(kw):
        tj = x5[:, :, j // 2:j // 2 + w_out, j % 2, :]   # (h_pad+1, 2, w_out, C)
        taps.append(jnp.transpose(tj, (1, 0, 2, 3)).reshape(2, h_pad + 1, wc))
    x_taps = jnp.stack(taps, axis=0)                     # (kw, 2, h_pad+1, wc)

    x_main = x_taps[:, :, :h_pad, :]                     # (kw, 2, h_pad, wc)
    # One halo row per tile: row-parity-0 plane at out-row (t+1)*th.
    x_halo = jnp.transpose(x_taps[:, 0, th::th, :], (1, 0, 2))   # (n_tiles, kw, wc)

    chunk = _pick_lane_chunk(wc)
    n_chunks = wc // chunk

    kernel = functools.partial(
        _dwconv_kernel, kw=kw, chunk=chunk, n_chunks=n_chunks)

    out_flat = pl.pallas_call(
        kernel,
        out_shape=jax.ShapeDtypeStruct((h_pad, wc), jnp.float32),
        grid=(n_tiles,),
        in_specs=[
            pl.BlockSpec((kw, 2, th, wc), lambda t: (0, 0, t, 0)),
            pl.BlockSpec((None, kw, wc), lambda t: (t, 0, 0)),
            pl.BlockSpec((kh, kw, wc), lambda t: (0, 0, 0)),
        ],
        out_specs=pl.BlockSpec((th, wc), lambda t: (t, 0)),
        compiler_params=pltpu.CompilerParams(
            dimension_semantics=("parallel",)),
    )(x_main, x_halo, w_flat)

    out = out_flat[:h_out].reshape(h_out, w_out, c)
    return jnp.transpose(out, (2, 0, 1))[None].astype(x_nchw.dtype)


if __name__ == "__main__":
    key = jax.random.PRNGKey(0)
    kx, kw_ = jax.random.split(key)

    # The module fixes C=144 (groups=144); use a small spatial extent (32x32),
    # which still exercises the row-tile grid (2 tiles of 8 output rows) and
    # lane chunking (wc = 16*144 = 2304 -> 2 chunks of 1152).
    C, H, W = 144, 32, 32
    x = jax.random.normal(kx, (1, C, H, W), dtype=jnp.float32)
    weight = jax.random.normal(kw_, (C, 1, 3, 3), dtype=jnp.float32) * 0.1

    w_out = (W + 2 * 1 - 3) // 2 + 1
    w_flat = prepare_depthwise_weights(weight, w_out)   # hoisted, per perf review

    y = depthwise_conv2d_s2(x, w_flat)
    y = jax.block_until_ready(y)

    # Reference check against XLA's grouped conv.
    y_ref = lax.conv_general_dilated(
        x, weight,
        window_strides=(2, 2), padding=((1, 1), (1, 1)),
        dimension_numbers=("NCHW", "OIHW", "NCHW"),
        feature_group_count=C,
    )
    assert y.shape == (1, C, H // 2, W // 2), y.shape
    assert jnp.allclose(y, y_ref, atol=1e-4, rtol=1e-4), float(
        jnp.max(jnp.abs(y - y_ref)))

    print("KERNEL_OK")
</pallas_src>

<mosaic_0001>
module attributes {stable_mosaic.version = 11 : i64} {
  func.func @_dwconv_kernel(%arg0: i32, %arg1: memref<3x2x8x2304xf32, #tpu.memory_space<vmem>>, %arg2: memref<1x3x2304xf32, #tpu.memory_space<vmem>>, %arg3: memref<3x3x2304xf32, #tpu.memory_space<vmem>>, %arg4: memref<8x2304xf32, #tpu.memory_space<vmem>>) attributes {dimension_semantics = [#tpu.dimension_semantics<parallel>], iteration_bounds = array<i64: 2>, scalar_prefetch = 0 : i64, scratch_operands = 0 : i64, tpu.core_type = #tpu.core_type<tc>, window_params = [{transform_indices = @transform_0, window_bounds = array<i64: 3, 2, 8, 2304>}, {transform_indices = @transform_1, window_bounds = array<i64: 1, 3, 2304>}, {pipeline_mode = #tpu.pipeline_mode<synchronous>, transform_indices = @transform_2, window_bounds = array<i64: 3, 3, 2304>}, {transform_indices = @transform_3, window_bounds = array<i64: 8, 2304>}]} {
    %c0 = arith.constant 0 : index
    %c0_0 = arith.constant 0 : index
    %c0_1 = arith.constant 0 : index
    %c0_2 = arith.constant 0 : index
    %0 = vector.load %arg1[%c0, %c0_0, %c0_1, %c0_2] : memref<3x2x8x2304xf32, #tpu.memory_space<vmem>>, vector<1x1x8x1152xf32>
    %1 = vector.shape_cast %0 : vector<1x1x8x1152xf32> to vector<8x1152xf32>
    %c0_3 = arith.constant 0 : index
    %c1 = arith.constant 1 : index
    %c0_4 = arith.constant 0 : index
    %c0_5 = arith.constant 0 : index
    %2 = vector.load %arg1[%c0_3, %c1, %c0_4, %c0_5] : memref<3x2x8x2304xf32, #tpu.memory_space<vmem>>, vector<1x1x8x1152xf32>
    %3 = vector.shape_cast %2 : vector<1x1x8x1152xf32> to vector<8x1152xf32>
    %c0_6 = arith.constant 0 : index
    %c0_7 = arith.constant 0 : index
    %c0_8 = arith.constant 0 : index
    %4 = vector.load %arg2[%c0_6, %c0_7, %c0_8] : memref<1x3x2304xf32, #tpu.memory_space<vmem>>, vector<1x1x1152xf32>
    %5 = vector.shape_cast %4 : vector<1x1x1152xf32> to vector<1x1152xf32>
    %6 = vector.extract_strided_slice %1 {offsets = [1, 0], sizes = [7, 1152], strides = [1, 1]} : vector<8x1152xf32> to vector<7x1152xf32>
    %7 = tpu.concatenate %6, %5 in 0 : vector<7x1152xf32>, vector<1x1152xf32> -> vector<8x1152xf32>
    %c0_9 = arith.constant 0 : index
    %c0_10 = arith.constant 0 : index
    %c0_11 = arith.constant 0 : index
    %8 = vector.load %arg3[%c0_9, %c0_10, %c0_11] : memref<3x3x2304xf32, #tpu.memory_space<vmem>>, vector<1x1x1152xf32>
    %9 = vector.shape_cast %8 : vector<1x1x1152xf32> to vector<1152xf32>
    %c1_12 = arith.constant 1 : index
    %c0_13 = arith.constant 0 : index
    %c0_14 = arith.constant 0 : index
    %10 = vector.load %arg3[%c1_12, %c0_13, %c0_14] : memref<3x3x2304xf32, #tpu.memory_space<vmem>>, vector<1x1x1152xf32>
    %11 = vector.shape_cast %10 : vector<1x1x1152xf32> to vector<1152xf32>
    %c2 = arith.constant 2 : index
    %c0_15 = arith.constant 0 : index
    %c0_16 = arith.constant 0 : index
    %12 = vector.load %arg3[%c2, %c0_15, %c0_16] : memref<3x3x2304xf32, #tpu.memory_space<vmem>>, vector<1x1x1152xf32>
    %13 = vector.shape_cast %12 : vector<1x1x1152xf32> to vector<1152xf32>
    %14 = vector.shape_cast %9 : vector<1152xf32> to vector<1x1152xf32>
    %15 = vector.broadcast %14 : vector<1x1152xf32> to vector<8x1152xf32>
    %16 = arith.mulf %1, %15 : vector<8x1152xf32>
    %17 = vector.shape_cast %11 : vector<1152xf32> to vector<1x1152xf32>
    %18 = vector.broadcast %17 : vector<1x1152xf32> to vector<8x1152xf32>
    %19 = arith.mulf %3, %18 : vector<8x1152xf32>
    %20 = arith.addf %16, %19 : vector<8x1152xf32>
    %21 = vector.shape_cast %13 : vector<1152xf32> to vector<1x1152xf32>
    %22 = vector.broadcast %21 : vector<1x1152xf32> to vector<8x1152xf32>
    %23 = arith.mulf %7, %22 : vector<8x1152xf32>
    %24 = arith.addf %20, %23 : vector<8x1152xf32>
    %c1_17 = arith.constant 1 : index
    %c0_18 = arith.constant 0 : index
    %c0_19 = arith.constant 0 : index
    %c0_20 = arith.constant 0 : index
    %25 = vector.load %arg1[%c1_17, %c0_18, %c0_19, %c0_20] : memref<3x2x8x2304xf32, #tpu.memory_space<vmem>>, vector<1x1x8x1152xf32>
    %26 = vector.shape_cast %25 : vector<1x1x8x1152xf32> to vector<8x1152xf32>
    %c1_21 = arith.constant 1 : index
    %c1_22 = arith.constant 1 : index
    %c0_23 = arith.constant 0 : index
    %c0_24 = arith.constant 0 : index
    %27 = vector.load %arg1[%c1_21, %c1_22, %c0_23, %c0_24] : memref<3x2x8x2304xf32, #tpu.memory_space<vmem>>, vector<1x1x8x1152xf32>
    %28 = vector.shape_cast %27 : vector<1x1x8x1152xf32> to vector<8x1152xf32>
    %c0_25 = arith.constant 0 : index
    %c1_26 = arith.constant 1 : index
    %c0_27 = arith.constant 0 : index
    %29 = vector.load %arg2[%c0_25, %c1_26, %c0_27] : memref<1x3x2304xf32, #tpu.memory_space<vmem>>, vector<1x1x1152xf32>
    %30 = vector.shape_cast %29 : vector<1x1x1152xf32> to vector<1x1152xf32>
    %31 = vector.extract_strided_slice %26 {offsets = [1, 0], sizes = [7, 1152], strides = [1, 1]} : vector<8x1152xf32> to vector<7x1152xf32>
    %32 = tpu.concatenate %31, %30 in 0 : vector<7x1152xf32>, vector<1x1152xf32> -> vector<8x1152xf32>
    %c0_28 = arith.constant 0 : index
    %c1_29 = arith.constant 1 : index
    %c0_30 = arith.constant 0 : index
    %33 = vector.load %arg3[%c0_28, %c1_29, %c0_30] : memref<3x3x2304xf32, #tpu.memory_space<vmem>>, vector<1x1x1152xf32>
    %34 = vector.shape_cast %33 : vector<1x1x1152xf32> to vector<1152xf32>
    %c1_31 = arith.constant 1 : index
    %c1_32 = arith.constant 1 : index
    %c0_33 = arith.constant 0 : index
    %35 = vector.load %arg3[%c1_31, %c1_32, %c0_33] : memref<3x3x2304xf32, #tpu.memory_space<vmem>>, vector<1x1x1152xf32>
    %36 = vector.shape_cast %35 : vector<1x1x1152xf32> to vector<1152xf32>
    %c2_34 = arith.constant 2 : index
    %c1_35 = arith.constant 1 : index
    %c0_36 = arith.constant 0 : index
    %37 = vector.load %arg3[%c2_34, %c1_35, %c0_36] : memref<3x3x2304xf32, #tpu.memory_space<vmem>>, vector<1x1x1152xf32>
    %38 = vector.shape_cast %37 : vector<1x1x1152xf32> to vector<1152xf32>
    %39 = vector.shape_cast %34 : vector<1152xf32> to vector<1x1152xf32>
    %40 = vector.broadcast %39 : vector<1x1152xf32> to vector<8x1152xf32>
    %41 = arith.mulf %26, %40 : vector<8x1152xf32>
    %42 = arith.addf %24, %41 : vector<8x1152xf32>
    %43 = vector.shape_cast %36 : vector<1152xf32> to vector<1x1152xf32>
    %44 = vector.broadcast %43 : vector<1x1152xf32> to vector<8x1152xf32>
    %45 = arith.mulf %28, %44 : vector<8x1152xf32>
    %46 = arith.addf %42, %45 : vector<8x1152xf32>
    %47 = vector.shape_cast %38 : vector<1152xf32> to vector<1x1152xf32>
    %48 = vector.broadcast %47 : vector<1x1152xf32> to vector<8x1152xf32>
    %49 = arith.mulf %32, %48 : vector<8x1152xf32>
    %50 = arith.addf %46, %49 : vector<8x1152xf32>
    %c2_37 = arith.constant 2 : index
    %c0_38 = arith.constant 0 : index
    %c0_39 = arith.constant 0 : index
    %c0_40 = arith.constant 0 : index
    %51 = vector.load %arg1[%c2_37, %c0_38, %c0_39, %c0_40] : memref<3x2x8x2304xf32, #tpu.memory_space<vmem>>, vector<1x1x8x1152xf32>
    %52 = vector.shape_cast %51 : vector<1x1x8x1152xf32> to vector<8x1152xf32>
    %c2_41 = arith.constant 2 : index
    %c1_42 = arith.constant 1 : index
    %c0_43 = arith.constant 0 : index
    %c0_44 = arith.constant 0 : index
    %53 = vector.load %arg1[%c2_41, %c1_42, %c0_43, %c0_44] : memref<3x2x8x2304xf32, #tpu.memory_space<vmem>>, vector<1x1x8x1152xf32>
    %54 = vector.shape_cast %53 : vector<1x1x8x1152xf32> to vector<8x1152xf32>
    %c0_45 = arith.constant 0 : index
    %c2_46 = arith.constant 2 : index
    %c0_47 = arith.constant 0 : index
    %55 = vector.load %arg2[%c0_45, %c2_46, %c0_47] : memref<1x3x2304xf32, #tpu.memory_space<vmem>>, vector<1x1x1152xf32>
    %56 = vector.shape_cast %55 : vector<1x1x1152xf32> to vector<1x1152xf32>
    %57 = vector.extract_strided_slice %52 {offsets = [1, 0], sizes = [7, 1152], strides = [1, 1]} : vector<8x1152xf32> to vector<7x1152xf32>
    %58 = tpu.concatenate %57, %56 in 0 : vector<7x1152xf32>, vector<1x1152xf32> -> vector<8x1152xf32>
    %c0_48 = arith.constant 0 : index
    %c2_49 = arith.constant 2 : index
    %c0_50 = arith.constant 0 : index
    %59 = vector.load %arg3[%c0_48, %c2_49, %c0_50] : memref<3x3x2304xf32, #tpu.memory_space<vmem>>, vector<1x1x1152xf32>
    %60 = vector.shape_cast %59 : vector<1x1x1152xf32> to vector<1152xf32>
    %c1_51 = arith.constant 1 : index
    %c2_52 = arith.constant 2 : index
    %c0_53 = arith.constant 0 : index
    %61 = vector.load %arg3[%c1_51, %c2_52, %c0_53] : memref<3x3x2304xf32, #tpu.memory_space<vmem>>, vector<1x1x1152xf32>
    %62 = vector.shape_cast %61 : vector<1x1x1152xf32> to vector<1152xf32>
    %c2_54 = arith.constant 2 : index
    %c2_55 = arith.constant 2 : index
    %c0_56 = arith.constant 0 : index
    %63 = vector.load %arg3[%c2_54, %c2_55, %c0_56] : memref<3x3x2304xf32, #tpu.memory_space<vmem>>, vector<1x1x1152xf32>
    %64 = vector.shape_cast %63 : vector<1x1x1152xf32> to vector<1152xf32>
    %65 = vector.shape_cast %60 : vector<1152xf32> to vector<1x1152xf32>
    %66 = vector.broadcast %65 : vector<1x1152xf32> to vector<8x1152xf32>
    %67 = arith.mulf %52, %66 : vector<8x1152xf32>
    %68 = arith.addf %50, %67 : vector<8x1152xf32>
    %69 = vector.shape_cast %62 : vector<1152xf32> to vector<1x1152xf32>
    %70 = vector.broadcast %69 : vector<1x1152xf32> to vector<8x1152xf32>
    %71 = arith.mulf %54, %70 : vector<8x1152xf32>
    %72 = arith.addf %68, %71 : vector<8x1152xf32>
    %73 = vector.shape_cast %64 : vector<1152xf32> to vector<1x1152xf32>
    %74 = vector.broadcast %73 : vector<1x1152xf32> to vector<8x1152xf32>
    %75 = arith.mulf %58, %74 : vector<8x1152xf32>
    %76 = arith.addf %72, %75 : vector<8x1152xf32>
    %c0_57 = arith.constant 0 : index
    %c0_58 = arith.constant 0 : index
    %77 = vector.load %arg4[%c0_57, %c0_58] : memref<8x2304xf32, #tpu.memory_space<vmem>>, vector<8x1152xf32>
    tpu.vector_store %arg4[%c0_57, %c0_58], %76 {strides = array<i32>} : memref<8x2304xf32, #tpu.memory_space<vmem>>, vector<8x1152xf32>,
    %c0_59 = arith.constant 0 : index
    %c0_60 = arith.constant 0 : index
    %c0_61 = arith.constant 0 : index
    %c1152 = arith.constant 1152 : index
    %78 = vector.load %arg1[%c0_59, %c0_60, %c0_61, %c1152] : memref<3x2x8x2304xf32, #tpu.memory_space<vmem>>, vector<1x1x8x1152xf32>
    %79 = vector.shape_cast %78 : vector<1x1x8x1152xf32> to vector<8x1152xf32>
    %c0_62 = arith.constant 0 : index
    %c1_63 = arith.constant 1 : index
    %c0_64 = arith.constant 0 : index
    %c1152_65 = arith.constant 1152 : index
    %80 = vector.load %arg1[%c0_62, %c1_63, %c0_64, %c1152_65] : memref<3x2x8x2304xf32, #tpu.memory_space<vmem>>, vector<1x1x8x1152xf32>
    %81 = vector.shape_cast %80 : vector<1x1x8x1152xf32> to vector<8x1152xf32>
    %c0_66 = arith.constant 0 : index
    %c0_67 = arith.constant 0 : index
    %c1152_68 = arith.constant 1152 : index
    %82 = vector.load %arg2[%c0_66, %c0_67, %c1152_68] : memref<1x3x2304xf32, #tpu.memory_space<vmem>>, vector<1x1x1152xf32>
    %83 = vector.shape_cast %82 : vector<1x1x1152xf32> to vector<1x1152xf32>
    %84 = vector.extract_strided_slice %79 {offsets = [1, 0], sizes = [7, 1152], strides = [1, 1]} : vector<8x1152xf32> to vector<7x1152xf32>
    %85 = tpu.concatenate %84, %83 in 0 : vector<7x1152xf32>, vector<1x1152xf32> -> vector<8x1152xf32>
    %c0_69 = arith.constant 0 : index
    %c0_70 = arith.constant 0 : index
    %c1152_71 = arith.constant 1152 : index
    %86 = vector.load %arg3[%c0_69, %c0_70, %c1152_71] : memref<3x3x2304xf32, #tpu.memory_space<vmem>>, vector<1x1x1152xf32>
    %87 = vector.shape_cast %86 : vector<1x1x1152xf32> to vector<1152xf32>
    %c1_72 = arith.constant 1 : index
    %c0_73 = arith.constant 0 : index
    %c1152_74 = arith.constant 1152 : index
    %88 = vector.load %arg3[%c1_72, %c0_73, %c1152_74] : memref<3x3x2304xf32, #tpu.memory_space<vmem>>, vector<1x1x1152xf32>
    %89 = vector.shape_cast %88 : vector<1x1x1152xf32> to vector<1152xf32>
    %c2_75 = arith.constant 2 : index
    %c0_76 = arith.constant 0 : index
    %c1152_77 = arith.constant 1152 : index
    %90 = vector.load %arg3[%c2_75, %c0_76, %c1152_77] : memref<3x3x2304xf32, #tpu.memory_space<vmem>>, vector<1x1x1152xf32>
    %91 = vector.shape_cast %90 : vector<1x1x1152xf32> to vector<1152xf32>
    %92 = vector.shape_cast %87 : vector<1152xf32> to vector<1x1152xf32>
    %93 = vector.broadcast %92 : vector<1x1152xf32> to vector<8x1152xf32>
    %94 = arith.mulf %79, %93 : vector<8x1152xf32>
    %95 = vector.shape_cast %89 : vector<1152xf32> to vector<1x1152xf32>
    %96 = vector.broadcast %95 : vector<1x1152xf32> to vector<8x1152xf32>
    %97 = arith.mulf %81, %96 : vector<8x1152xf32>
    %98 = arith.addf %94, %97 : vector<8x1152xf32>
    %99 = vector.shape_cast %91 : vector<1152xf32> to vector<1x1152xf32>
    %100 = vector.broadcast %99 : vector<1x1152xf32> to vector<8x1152xf32>
    %101 = arith.mulf %85, %100 : vector<8x1152xf32>
    %102 = arith.addf %98, %101 : vector<8x1152xf32>
    %c1_78 = arith.constant 1 : index
    %c0_79 = arith.constant 0 : index
    %c0_80 = arith.constant 0 : index
    %c1152_81 = arith.constant 1152 : index
    %103 = vector.load %arg1[%c1_78, %c0_79, %c0_80, %c1152_81] : memref<3x2x8x2304xf32, #tpu.memory_space<vmem>>, vector<1x1x8x1152xf32>
    %104 = vector.shape_cast %103 : vector<1x1x8x1152xf32> to vector<8x1152xf32>
    %c1_82 = arith.constant 1 : index
    %c1_83 = arith.constant 1 : index
    %c0_84 = arith.constant 0 : index
    %c1152_85 = arith.constant 1152 : index
    %105 = vector.load %arg1[%c1_82, %c1_83, %c0_84, %c1152_85] : memref<3x2x8x2304xf32, #tpu.memory_space<vmem>>, vector<1x1x8x1152xf32>
    %106 = vector.shape_cast %105 : vector<1x1x8x1152xf32> to vector<8x1152xf32>
    %c0_86 = arith.constant 0 : index
    %c1_87 = arith.constant 1 : index
    %c1152_88 = arith.constant 1152 : index
    %107 = vector.load %arg2[%c0_86, %c1_87, %c1152_88] : memref<1x3x2304xf32, #tpu.memory_space<vmem>>, vector<1x1x1152xf32>
    %108 = vector.shape_cast %107 : vector<1x1x1152xf32> to vector<1x1152xf32>
    %109 = vector.extract_strided_slice %104 {offsets = [1, 0], sizes = [7, 1152], strides = [1, 1]} : vector<8x1152xf32> to vector<7x1152xf32>
    %110 = tpu.concatenate %109, %108 in 0 : vector<7x1152xf32>, vector<1x1152xf32> -> vector<8x1152xf32>
    %c0_89 = arith.constant 0 : index
    %c1_90 = arith.constant 1 : index
    %c1152_91 = arith.constant 1152 : index
    %111 = vector.load %arg3[%c0_89, %c1_90, %c1152_91] : memref<3x3x2304xf32, #tpu.memory_space<vmem>>, vector<1x1x1152xf32>
    %112 = vector.shape_cast %111 : vector<1x1x1152xf32> to vector<1152xf32>
    %c1_92 = arith.constant 1 : index
    %c1_93 = arith.constant 1 : index
    %c1152_94 = arith.constant 1152 : index
    %113 = vector.load %arg3[%c1_92, %c1_93, %c1152_94] : memref<3x3x2304xf32, #tpu.memory_space<vmem>>, vector<1x1x1152xf32>
    %114 = vector.shape_cast %113 : vector<1x1x1152xf32> to vector<1152xf32>
    %c2_95 = arith.constant 2 : index
    %c1_96 = arith.constant 1 : index
    %c1152_97 = arith.constant 1152 : index
    %115 = vector.load %arg3[%c2_95, %c1_96, %c1152_97] : memref<3x3x2304xf32, #tpu.memory_space<vmem>>, vector<1x1x1152xf32>
    %116 = vector.shape_cast %115 : vector<1x1x1152xf32> to vector<1152xf32>
    %117 = vector.shape_cast %112 : vector<1152xf32> to vector<1x1152xf32>
    %118 = vector.broadcast %117 : vector<1x1152xf32> to vector<8x1152xf32>
    %119 = arith.mulf %104, %118 : vector<8x1152xf32>
    %120 = arith.addf %102, %119 : vector<8x1152xf32>
    %121 = vector.shape_cast %114 : vector<1152xf32> to vector<1x1152xf32>
    %122 = vector.broadcast %121 : vector<1x1152xf32> to vector<8x1152xf32>
    %123 = arith.mulf %106, %122 : vector<8x1152xf32>
    %124 = arith.addf %120, %123 : vector<8x1152xf32>
    %125 = vector.shape_cast %116 : vector<1152xf32> to vector<1x1152xf32>
    %126 = vector.broadcast %125 : vector<1x1152xf32> to vector<8x1152xf32>
    %127 = arith.mulf %110, %126 : vector<8x1152xf32>
    %128 = arith.addf %124, %127 : vector<8x1152xf32>
    %c2_98 = arith.constant 2 : index
    %c0_99 = arith.constant 0 : index
    %c0_100 = arith.constant 0 : index
    %c1152_101 = arith.constant 1152 : index
    %129 = vector.load %arg1[%c2_98, %c0_99, %c0_100, %c1152_101] : memref<3x2x8x2304xf32, #tpu.memory_space<vmem>>, vector<1x1x8x1152xf32>
    %130 = vector.shape_cast %129 : vector<1x1x8x1152xf32> to vector<8x1152xf32>
    %c2_102 = arith.constant 2 : index
    %c1_103 = arith.constant 1 : index
    %c0_104 = arith.constant 0 : index
    %c1152_105 = arith.constant 1152 : index
    %131 = vector.load %arg1[%c2_102, %c1_103, %c0_104, %c1152_105] : memref<3x2x8x2304xf32, #tpu.memory_space<vmem>>, vector<1x1x8x1152xf32>
    %132 = vector.shape_cast %131 : vector<1x1x8x1152xf32> to vector<8x1152xf32>
    %c0_106 = arith.constant 0 : index
    %c2_107 = arith.constant 2 : index
    %c1152_108 = arith.constant 1152 : index
    %133 = vector.load %arg2[%c0_106, %c2_107, %c1152_108] : memref<1x3x2304xf32, #tpu.memory_space<vmem>>, vector<1x1x1152xf32>
    %134 = vector.shape_cast %133 : vector<1x1x1152xf32> to vector<1x1152xf32>
    %135 = vector.extract_strided_slice %130 {offsets = [1, 0], sizes = [7, 1152], strides = [1, 1]} : vector<8x1152xf32> to vector<7x1152xf32>
    %136 = tpu.concatenate %135, %134 in 0 : vector<7x1152xf32>, vector<1x1152xf32> -> vector<8x1152xf32>
    %c0_109 = arith.constant 0 : index
    %c2_110 = arith.constant 2 : index
    %c1152_111 = arith.constant 1152 : index
    %137 = vector.load %arg3[%c0_109, %c2_110, %c1152_111] : memref<3x3x2304xf32, #tpu.memory_space<vmem>>, vector<1x1x1152xf32>
    %138 = vector.shape_cast %137 : vector<1x1x1152xf32> to vector<1152xf32>
    %c1_112 = arith.constant 1 : index
    %c2_113 = arith.constant 2 : index
    %c1152_114 = arith.constant 1152 : index
    %139 = vector.load %arg3[%c1_112, %c2_113, %c1152_114] : memref<3x3x2304xf32, #tpu.memory_space<vmem>>, vector<1x1x1152xf32>
    %140 = vector.shape_cast %139 : vector<1x1x1152xf32> to vector<1152xf32>
    %c2_115 = arith.constant 2 : index
    %c2_116 = arith.constant 2 : index
    %c1152_117 = arith.constant 1152 : index
    %141 = vector.load %arg3[%c2_115, %c2_116, %c1152_117] : memref<3x3x2304xf32, #tpu.memory_space<vmem>>, vector<1x1x1152xf32>
    %142 = vector.shape_cast %141 : vector<1x1x1152xf32> to vector<1152xf32>
    %143 = vector.shape_cast %138 : vector<1152xf32> to vector<1x1152xf32>
    %144 = vector.broadcast %143 : vector<1x1152xf32> to vector<8x1152xf32>
    %145 = arith.mulf %130, %144 : vector<8x1152xf32>
    %146 = arith.addf %128, %145 : vector<8x1152xf32>
    %147 = vector.shape_cast %140 : vector<1152xf32> to vector<1x1152xf32>
    %148 = vector.broadcast %147 : vector<1x1152xf32> to vector<8x1152xf32>
    %149 = arith.mulf %132, %148 : vector<8x1152xf32>
    %150 = arith.addf %146, %149 : vector<8x1152xf32>
    %151 = vector.shape_cast %142 : vector<1152xf32> to vector<1x1152xf32>
    %152 = vector.broadcast %151 : vector<1x1152xf32> to vector<8x1152xf32>
    %153 = arith.mulf %136, %152 : vector<8x1152xf32>
    %154 = arith.addf %150, %153 : vector<8x1152xf32>
    %c0_118 = arith.constant 0 : index
    %c1152_119 = arith.constant 1152 : index
    %155 = vector.load %arg4[%c0_118, %c1152_119] : memref<8x2304xf32, #tpu.memory_space<vmem>>, vector<8x1152xf32>
    tpu.vector_store %arg4[%c0_118, %c1152_119], %154 {strides = array<i32>} : memref<8x2304xf32, #tpu.memory_space<vmem>>, vector<8x1152xf32>,
    return
  }
  func.func @transform_0(%arg0: i32) -> (i32, i32, i32, i32) {
    %c0_i32 = arith.constant 0 : i32
    %c0_i32_0 = arith.constant 0 : i32
    %c0_i32_1 = arith.constant 0 : i32
    %c0_i32_2 = arith.constant 0 : i32
    return %c0_i32, %c0_i32_0, %arg0, %c0_i32_1 : i32, i32, i32, i32
  }
  func.func @transform_1(%arg0: i32) -> (i32, i32, i32) {
    %c0_i32 = arith.constant 0 : i32
    %c0_i32_0 = arith.constant 0 : i32
    %c0_i32_1 = arith.constant 0 : i32
    return %arg0, %c0_i32, %c0_i32_0 : i32, i32, i32
  }
  func.func @transform_2(%arg0: i32) -> (i32, i32, i32) {
    %c0_i32 = arith.constant 0 : i32
    %c0_i32_0 = arith.constant 0 : i32
    %c0_i32_1 = arith.constant 0 : i32
    %c0_i32_2 = arith.constant 0 : i32
    return %c0_i32, %c0_i32_0, %c0_i32_1 : i32, i32, i32
  }
  func.func @transform_3(%arg0: i32) -> (i32, i32) {
    %c0_i32 = arith.constant 0 : i32
    %c0_i32_0 = arith.constant 0 : i32
    return %arg0, %c0_i32 : i32, i32
  }
}

</mosaic_0001>

<llo_original>
// kernel: depthwise_conv2d_s2.1
$region0: #{depthwise_conv2d_s2.1}
  #allocation0 [shape = 'u32[]', space=smem, size = 0x4, offset = 0x4, fixed_abs, tag = 'smem constant byte address 0x4 - core index']
  #allocation1 [shape = 'u32[144,128]{1,0:T(1,128)}', space=vmem, size = 0x12000, scoped, tag = 'internal scratch']
  %s0 = inlined_call_operand.vmem [shape: f32[3,2,16,2304], index: 0, kind: input, shape index: {}]
  %s1 = inlined_call_operand.vmem [shape: f32[2,3,2304], index: 1, kind: input, shape index: {}]
  %s2 = inlined_call_operand.vmem [shape: f32[3,3,2304], index: 2, kind: input, shape index: {}]
  %s3 = inlined_call_operand.vmem [shape: f32[16,2304], index: 3, kind: output, shape index: {}]
  %s4 = sld [smem:[#allocation0]]
  $region68: #{depthwise_conv2d_s2.1} parent=0
    _
  %s6 = ssub.s32 1, %s4
  %s7 = scalar_select 0, %s6, %s4
  $region1: #{depthwise_conv2d_s2.1} parent=0
    #allocation2 [shape = 'u8[884736]{0}', space=vmem, size = 0xd8000, scoped, tag = 'input window, operand 0']
    loop: start=0, step=1, limit=4
    $region2: #{depthwise_conv2d_s2.1} parent=1 // loop_pre_header
      _
    $region3: #{depthwise_conv2d_s2.1} parent=1 // loop_header
      %s9 = sphi 0, %s13
      %p10 = scmp.ge.s32.totalorder %s9, 4
      %s19 = sphi 0, %s21
      %s22 = sphi 0, %s19
      %s23 = sphi 0, %s22
      %s39 = sphi 0, %s23
      %s45 = sphi 0, %s47
      %s48 = sphi 0, %s45
      %s49 = sphi 0, %s48
      %s65 = sphi 0, %s49
      %s69 = sphi 0, %s69
      %s71 = sphi 0, %s69
      %s72 = sphi 0, %s71
      %s86 = sphi 0, %s72
      %s92 = sphi 0, %s94
      %s95 = sphi 0, %s92
      %s96 = sphi 0, %s95
      %s112 = sphi 0, %s96
    $region4: #{depthwise_conv2d_s2.1} parent=1 // loop_header_branch
      %12 = sbr.rel (%p10) target = $region8
    $region5: #{depthwise_conv2d_s2.1} parent=1 // loop_body
      %s14 = ssub.s32 %s9, 1
      %s15 = ssub.s32 %s9, 2
      %s16 = sadd.s32 %s9, 1
      %s17 = ssub.s32 %s9, %s16
      %p18 = scmp.eq.s32.totalorder %s17, 0
      %s20 = sadd.s32 %s19, 1
      %s21 = scalar_select %p18, %s19, %s20
      %p24 = pneg %p18
      %p25 = scmp.eq.s32.totalorder %s9, 1
      %p26 = por %p24, %p25
      %p27 = scmp.ne.s32.totalorder %s19, %s22
      %p28 = scmp.eq.s32.totalorder %s9, 0
      %p29 = por %p27, %p28
      %p30 = scmp.ne.s32.totalorder %s19, %s22
      %p31 = scmp.eq.s32.totalorder %s14, 1
      %p32 = por %p30, %p31
      %p33 = scmp.ne.s32.totalorder %s22, %s23
      %p34 = scmp.eq.s32.totalorder %s14, 0
      %p35 = por %p33, %p34
      %p36 = scmp.ne.s32.totalorder %s22, %s23
      %p37 = scmp.eq.s32.totalorder %s15, 1
      %p38 = por %p36, %p37
      %p40 = scmp.ne.s32.totalorder %s23, %s39
      %p41 = scmp.eq.s32.totalorder %s15, 0
      %p42 = por %p40, %p41
      %s43 = ssub.s32 %s9, %s16
      %p44 = scmp.eq.s32.totalorder %s43, 0
      %s46 = sadd.s32 %s45, 1
      %s47 = scalar_select %p44, %s45, %s46
      %p50 = pneg %p44
      %p51 = scmp.eq.s32.totalorder %s9, 1
      %p52 = por %p50, %p51
      %p53 = scmp.ne.s32.totalorder %s45, %s48
      %p54 = scmp.eq.s32.totalorder %s9, 0
      %p55 = por %p53, %p54
      %p56 = scmp.ne.s32.totalorder %s45, %s48
      %p57 = scmp.eq.s32.totalorder %s14, 1
      %p58 = por %p56, %p57
      %p59 = scmp.ne.s32.totalorder %s48, %s49
      %p60 = scmp.eq.s32.totalorder %s14, 0
      %p61 = por %p59, %p60
      %p62 = scmp.ne.s32.totalorder %s48, %s49
      %p63 = scmp.eq.s32.totalorder %s15, 1
      %p64 = por %p62, %p63
      %p66 = scmp.ne.s32.totalorder %s49, %s65
      %p67 = scmp.eq.s32.totalorder %s15, 0
      %p68 = por %p66, %p67
      %s70 = sadd.s32 %s69, 1
      %p73 = scmp.eq.s32.totalorder %s9, 1
      %p74 = scmp.ne.s32.totalorder %s69, %s71
      %p75 = scmp.eq.s32.totalorder %s9, 0
      %p76 = por %p74, %p75
      %p77 = scmp.ne.s32.totalorder %s69, %s71
      %p78 = scmp.eq.s32.totalorder %s14, 1
      %p79 = por %p77, %p78
      %p80 = scmp.ne.s32.totalorder %s71, %s72
      %p81 = scmp.eq.s32.totalorder %s14, 0
      %p82 = por %p80, %p81
      %p83 = scmp.ne.s32.totalorder %s71, %s72
      %p84 = scmp.eq.s32.totalorder %s15, 1
      %p85 = por %p83, %p84
      %p87 = scmp.ne.s32.totalorder %s72, %s86
      %p88 = scmp.eq.s32.totalorder %s15, 0
      %p89 = por %p87, %p88
      %s90 = ssub.s32 %s9, %s16
      %p91 = scmp.eq.s32.totalorder %s90, 0
      %s93 = sadd.s32 %s92, 1
      %s94 = scalar_select %p91, %s92, %s93
      %p97 = pneg %p91
      %p98 = scmp.eq.s32.totalorder %s9, 1
      %p99 = por %p97, %p98
      %p100 = scmp.ne.s32.totalorder %s92, %s95
      %p101 = scmp.eq.s32.totalorder %s9, 0
      %p102 = por %p100, %p101
      %p103 = scmp.ne.s32.totalorder %s92, %s95
      %p104 = scmp.eq.s32.totalorder %s14, 1
      %p105 = por %p103, %p104
      %p106 = scmp.ne.s32.totalorder %s95, %s96
      %p107 = scmp.eq.s32.totalorder %s14, 0
      %p108 = por %p106, %p107
      %p109 = scmp.ne.s32.totalorder %s95, %s96
      %p110 = scmp.eq.s32.totalorder %s15, 1
      %p111 = por %p109, %p110
      %p113 = scmp.ne.s32.totalorder %s96, %s112
      %p114 = scmp.eq.s32.totalorder %s15, 0
      %p115 = por %p113, %p114
      %p116 = scmp.le.s32.totalorder 1, %s9
      %p117 = scmp.lt.s32.totalorder %s9, 3
      %p118 = pnand %p116, %p117
      %p119 = pneg %p118
      // Predicated region
      $region9: #{depthwise_conv2d_s2.1} parent=5 // pred_check
        _
      $region10: #{depthwise_conv2d_s2.1} parent=5 // pred_check_branch
        %121 = sbr.rel (%p118) target = $region12
      $region11: #{depthwise_conv2d_s2.1} parent=5 // pred_region
        %s122 = ssub.s32 %s9, 1
        // Predicated region
        $region13: #{depthwise_conv2d_s2.1} parent=11 // pred_check
          %p123 = pneg %p82
        $region14: #{depthwise_conv2d_s2.1} parent=11 // pred_check_branch
          %125 = sbr.rel (%p123) target = $region16
        $region15: #{depthwise_conv2d_s2.1} parent=11 // pred_region
          _
        $region16: #{depthwise_conv2d_s2.1} parent=11 // pred_fallthru
          _
      $region12: #{depthwise_conv2d_s2.1} parent=5 // pred_fallthru
        _
      %p126 = scmp.lt.s32.totalorder %s9, 2
      // Predicated region
      $region17: #{depthwise_conv2d_s2.1} parent=5 // pred_check
        %p127 = pneg %p126
      $region18: #{depthwise_conv2d_s2.1} parent=5 // pred_check_branch
        %129 = sbr.rel (%p127) target = $region20
      $region19: #{depthwise_conv2d_s2.1} parent=5 // pred_region
        // Predicated region
        $region21: #{depthwise_conv2d_s2.1} parent=19 // pred_check
          %p130 = pneg %p29
        $region22: #{depthwise_conv2d_s2.1} parent=19 // pred_check_branch
          %132 = sbr.rel (%p130) target = $region24
        $region23: #{depthwise_conv2d_s2.1} parent=19 // pred_region
          %s133 = sand.u32 %s19, 1
          %s134 = sand.u32 %s19, 1
          %s135 = smul.addr %s134, 864
          %s136 = scalar_lea.vmem [#allocation2], %s135
          %s137 = smul.addr %s9, 18
          %s138 = smul.addr %s137, 8
          %s139 = scalar_lea.vmem %s0, %s138
          // Predicated region
          $region25: #{depthwise_conv2d_s2.1} parent=23 // pred_check
            _
          $region26: #{depthwise_conv2d_s2.1} parent=23 // pred_check_branch
            %141 = sbr.rel (0) target = $region28
          $region27: #{depthwise_conv2d_s2.1} parent=23 // pred_region
            // Predicated region
            $region29: #{depthwise_conv2d_s2.1} parent=27 // pred_check
              _
            $region30: #{depthwise_conv2d_s2.1} parent=27 // pred_check_branch
              %143 = sbr.rel (0) target = $region32
            $region31: #{depthwise_conv2d_s2.1} parent=27 // pred_region
              loop: start=0, step=1, limit=1
              $region33: #{depthwise_conv2d_s2.1} parent=31 // loop_pre_header
                _
              $region34: #{depthwise_conv2d_s2.1} parent=31 // loop_header
                %s145 = sphi 0, %s149
                %p146 = scmp.ge.s32.totalorder %s145, 1
                %s150 = sphi %s139, %s139
                %s151 = sphi %s136, %s136
              $region35: #{depthwise_conv2d_s2.1} parent=31 // loop_header_branch
                %148 = sbr.rel (%p146) target = $region39
              $region36: #{depthwise_conv2d_s2.1} parent=31 // loop_body
                %v152 = vld [vmem:[%s150] sm:$0xff]
                %153 = vst [vmem:[%s151] sm:$0xff] %v152
                %v154 = vld [vmem:[%s150 + $0x8] sm:$0xff]
                %155 = vst [vmem:[%s151 + $0x8] sm:$0xff] %v154
                %v156 = vld [vmem:[%s150 + $0x10] sm:$0xff]
                %157 = vst [vmem:[%s151 + $0x10] sm:$0xff] %v156
                %v158 = vld [vmem:[%s150 + $0x18] sm:$0xff]
                %159 = vst [vmem:[%s151 + $0x18] sm:$0xff] %v158
                %v160 = vld [vmem:[%s150 + $0x20] sm:$0xff]
                %161 = vst [vmem:[%s151 + $0x20] sm:$0xff] %v160
                %v162 = vld [vmem:[%s150 + $0x28] sm:$0xff]
                %163 = vst [vmem:[%s151 + $0x28] sm:$0xff] %v162
                %v164 = vld [vmem:[%s150 + $0x30] sm:$0xff]
                %165 = vst [vmem:[%s151 + $0x30] sm:$0xff] %v164
                %v166 = vld [vmem:[%s150 + $0x38] sm:$0xff]
                %167 = vst [vmem:[%s151 + $0x38] sm:$0xff] %v166
                %v168 = vld [vmem:[%s150 + $0x40] sm:$0xff]
                %169 = vst [vmem:[%s151 + $0x40] sm:$0xff] %v168
                %v170 = vld [vmem:[%s150 + $0x48] sm:$0xff]
                %171 = vst [vmem:[%s151 + $0x48] sm:$0xff] %v170
                %v172 = vld [vmem:[%s150 + $0x50] sm:$0xff]
                %173 = vst [vmem:[%s151 + $0x50] sm:$0xff] %v172
                %v174 = vld [vmem:[%s150 + $0x58] sm:$0xff]
                %175 = vst [vmem:[%s151 + $0x58] sm:$0xff] %v174
                %v176 = vld [vmem:[%s150 + $0x60] sm:$0xff]
                %177 = vst [vmem:[%s151 + $0x60] sm:$0xff] %v176
                %v178 = vld [vmem:[%s150 + $0x68] sm:$0xff]
                %179 = vst [vmem:[%s151 + $0x68] sm:$0xff] %v178
                %v180 = vld [vmem:[%s150 + $0x70] sm:$0xff]
                %181 = vst [vmem:[%s151 + $0x70] sm:$0xff] %v180
                %v182 = vld [vmem:[%s150 + $0x78] sm:$0xff]
                %183 = vst [vmem:[%s151 + $0x78] sm:$0xff] %v182
                %v184 = vld [vmem:[%s150 + $0x80] sm:$0xff]
                %185 = vst [vmem:[%s151 + $0x80] sm:$0xff] %v184
                %v186 = vld [vmem:[%s150 + $0x88] sm:$0xff]
                %187 = vst [vmem:[%s151 + $0x88] sm:$0xff] %v186
                %v188 = vld [vmem:[%s150 + $0x120] sm:$0xff]
                %189 = vst [vmem:[%s151 + $0x90] sm:$0xff] %v188
                %v190 = vld [vmem:[%s150 + $0x128] sm:$0xff]
                %191 = vst [vmem:[%s151 + $0x98] sm:$0xff] %v190
                %v192 = vld [vmem:[%s150 + $0x130] sm:$0xff]
                %193 = vst [vmem:[%s151 + $0xa0] sm:$0xff] %v192
                %v194 = vld [vmem:[%s150 + $0x138] sm:$0xff]
                %195 = vst [vmem:[%s151 + $0xa8] sm:$0xff] %v194
                %v196 = vld [vmem:[%s150 + $0x140] sm:$0xff]
                %197 = vst [vmem:[%s151 + $0xb0] sm:$0xff] %v196
                %v198 = vld [vmem:[%s150 + $0x148] sm:$0xff]
                %199 = vst [vmem:[%s151 + $0xb8] sm:$0xff] %v198
                %v200 = vld [vmem:[%s150 + $0x150] sm:$0xff]
                %201 = vst [vmem:[%s151 + $0xc0] sm:$0xff] %v200
                %v202 = vld [vmem:[%s150 + $0x158] sm:$0xff]
                %203 = vst [vmem:[%s151 + $0xc8] sm:$0xff] %v202
                %v204 = vld [vmem:[%s150 + $0x160] sm:$0xff]
                %205 = vst [vmem:[%s151 + $0xd0] sm:$0xff] %v204
                %v206 = vld [vmem:[%s150 + $0x168] sm:$0xff]
                %207 = vst [vmem:[%s151 + $0xd8] sm:$0xff] %v206
                %v208 = vld [vmem:[%s150 + $0x170] sm:$0xff]
                %209 = vst [vmem:[%s151 + $0xe0] sm:$0xff] %v208
                %v210 = vld [vmem:[%s150 + $0x178] sm:$0xff]
                %211 = vst [vmem:[%s151 + $0xe8] sm:$0xff] %v210
                %v212 = vld [vmem:[%s150 + $0x180] sm:$0xff]
                %213 = vst [vmem:[%s151 + $0xf0] sm:$0xff] %v212
                %v214 = vld [vmem:[%s150 + $0x188] sm:$0xff]
                %215 = vst [vmem:[%s151 + $0xf8] sm:$0xff] %v214
                %v216 = vld [vmem:[%s150 + $0x190] sm:$0xff]
                %217 = vst [vmem:[%s151 + $0x100] sm:$0xff] %v216
                %v218 = vld [vmem:[%s150 + $0x198] sm:$0xff]
                %219 = vst [vmem:[%s151 + $0x108] sm:$0xff] %v218
                %v220 = vld [vmem:[%s150 + $0x1a0] sm:$0xff]
                %221 = vst [vmem:[%s151 + $0x110] sm:$0xff] %v220
                %v222 = vld [vmem:[%s150 + $0x1a8] sm:$0xff]
                %223 = vst [vmem:[%s151 + $0x118] sm:$0xff] %v222
                %v224 = vld [vmem:[%s150 + $0x240] sm:$0xff]
                %225 = vst [vmem:[%s151 + $0x120] sm:$0xff] %v224
                %v226 = vld [vmem:[%s150 + $0x248] sm:$0xff]
                %227 = vst [vmem:[%s151 + $0x128] sm:$0xff] %v226
                %v228 = vld [vmem:[%s150 + $0x250] sm:$0xff]
                %229 = vst [vmem:[%s151 + $0x130] sm:$0xff] %v228
                %v230 = vld [vmem:[%s150 + $0x258] sm:$0xff]
                %231 = vst [vmem:[%s151 + $0x138] sm:$0xff] %v230
                %v232 = vld [vmem:[%s150 + $0x260] sm:$0xff]
                %233 = vst [vmem:[%s151 + $0x140] sm:$0xff] %v232
                %v234 = vld [vmem:[%s150 + $0x268] sm:$0xff]
                %235 = vst [vmem:[%s151 + $0x148] sm:$0xff] %v234
                %v236 = vld [vmem:[%s150 + $0x270] sm:$0xff]
                %237 = vst [vmem:[%s151 + $0x150] sm:$0xff] %v236
                %v238 = vld [vmem:[%s150 + $0x278] sm:$0xff]
                %239 = vst [vmem:[%s151 + $0x158] sm:$0xff] %v238
                %v240 = vld [vmem:[%s150 + $0x280] sm:$0xff]
                %241 = vst [vmem:[%s151 + $0x160] sm:$0xff] %v240
                %v242 = vld [vmem:[%s150 + $0x288] sm:$0xff]
                %243 = vst [vmem:[%s151 + $0x168] sm:$0xff] %v242
                %v244 = vld [vmem:[%s150 + $0x290] sm:$0xff]
                %245 = vst [vmem:[%s151 + $0x170] sm:$0xff] %v244
                %v246 = vld [vmem:[%s150 + $0x298] sm:$0xff]
                %247 = vst [vmem:[%s151 + $0x178] sm:$0xff] %v246
                %v248 = vld [vmem:[%s150 + $0x2a0] sm:$0xff]
                %249 = vst [vmem:[%s151 + $0x180] sm:$0xff] %v248
                %v250 = vld [vmem:[%s150 + $0x2a8] sm:$0xff]
                %251 = vst [vmem:[%s151 + $0x188] sm:$0xff] %v250
                %v252 = vld [vmem:[%s150 + $0x2b0] sm:$0xff]
                %253 = vst [vmem:[%s151 + $0x190] sm:$0xff] %v252
                %v254 = vld [vmem:[%s150 + $0x2b8] sm:$0xff]
                %255 = vst [vmem:[%s151 + $0x198] sm:$0xff] %v254
                %v256 = vld [vmem:[%s150 + $0x2c0] sm:$0xff]
                %257 = vst [vmem:[%s151 + $0x1a0] sm:$0xff] %v256
                %v258 = vld [vmem:[%s150 + $0x2c8] sm:$0xff]
                %259 = vst [vmem:[%s151 + $0x1a8] sm:$0xff] %v258
                %v260 = vld [vmem:[%s150 + $0x360] sm:$0xff]
                %261 = vst [vmem:[%s151 + $0x1b0] sm:$0xff] %v260
                %v262 = vld [vmem:[%s150 + $0x368] sm:$0xff]
                %263 = vst [vmem:[%s151 + $0x1b8] sm:$0xff] %v262
                %v264 = vld [vmem:[%s150 + $0x370] sm:$0xff]
                %265 = vst [vmem:[%s151 + $0x1c0] sm:$0xff] %v264
                %v266 = vld [vmem:[%s150 + $0x378] sm:$0xff]
                %267 = vst [vmem:[%s151 + $0x1c8] sm:$0xff] %v266
                %v268 = vld [vmem:[%s150 + $0x380] sm:$0xff]
                %269 = vst [vmem:[%s151 + $0x1d0] sm:$0xff] %v268
                %v270 = vld [vmem:[%s150 + $0x388] sm:$0xff]
                %271 = vst [vmem:[%s151 + $0x1d8] sm:$0xff] %v270
                %v272 = vld [vmem:[%s150 + $0x390] sm:$0xff]
                %273 = vst [vmem:[%s151 + $0x1e0] sm:$0xff] %v272
                %v274 = vld [vmem:[%s150 + $0x398] sm:$0xff]
                %275 = vst [vmem:[%s151 + $0x1e8] sm:$0xff] %v274
                %v276 = vld [vmem:[%s150 + $0x3a0] sm:$0xff]
                %277 = vst [vmem:[%s151 + $0x1f0] sm:$0xff] %v276
                %v278 = vld [vmem:[%s150 + $0x3a8] sm:$0xff]
                %279 = vst [vmem:[%s151 + $0x1f8] sm:$0xff] %v278
                %v280 = vld [vmem:[%s150 + $0x3b0] sm:$0xff]
                %281 = vst [vmem:[%s151 + $0x200] sm:$0xff] %v280
                %v282 = vld [vmem:[%s150 + $0x3b8] sm:$0xff]
                %283 = vst [vmem:[%s151 + $0x208] sm:$0xff] %v282
                %v284 = vld [vmem:[%s150 + $0x3c0] sm:$0xff]
                %285 = vst [vmem:[%s151 + $0x210] sm:$0xff] %v284
                %v286 = vld [vmem:[%s150 + $0x3c8] sm:$0xff]
                %287 = vst [vmem:[%s151 + $0x218] sm:$0xff] %v286
                %v288 = vld [vmem:[%s150 + $0x3d0] sm:$0xff]
                %289 = vst [vmem:[%s151 + $0x220] sm:$0xff] %v288
                %v290 = vld [vmem:[%s150 + $0x3d8] sm:$0xff]
                %291 = vst [vmem:[%s151 + $0x228] sm:$0xff] %v290
                %v292 = vld [vmem:[%s150 + $0x3e0] sm:$0xff]
                %293 = vst [vmem:[%s151 + $0x230] sm:$0xff] %v292
                %v294 = vld [vmem:[%s150 + $0x3e8] sm:$0xff]
                %295 = vst [vmem:[%s151 + $0x238] sm:$0xff] %v294
                %v296 = vld [vmem:[%s150 + $0x480] sm:$0xff]
                %297 = vst [vmem:[%s151 + $0x240] sm:$0xff] %v296
                %v298 = vld [vmem:[%s150 + $0x488] sm:$0xff]
                %299 = vst [vmem:[%s151 + $0x248] sm:$0xff] %v298
                %v300 = vld [vmem:[%s150 + $0x490] sm:$0xff]
                %301 = vst [vmem:[%s151 + $0x250] sm:$0xff] %v300
                %v302 = vld [vmem:[%s150 + $0x498] sm:$0xff]
                %303 = vst [vmem:[%s151 + $0x258] sm:$0xff] %v302
                %v304 = vld [vmem:[%s150 + $0x4a0] sm:$0xff]
                %305 = vst [vmem:[%s151 + $0x260] sm:$0xff] %v304
                %v306 = vld [vmem:[%s150 + $0x4a8] sm:$0xff]
                %307 = vst [vmem:[%s151 + $0x268] sm:$0xff] %v306
                %v308 = vld [vmem:[%s150 + $0x4b0] sm:$0xff]
                %309 = vst [vmem:[%s151 + $0x270] sm:$0xff] %v308
                %v310 = vld [vmem:[%s150 + $0x4b8] sm:$0xff]
                %311 = vst [vmem:[%s151 + $0x278] sm:$0xff] %v310
                %v312 = vld [vmem:[%s150 + $0x4c0] sm:$0xff]
                %313 = vst [vmem:[%s151 + $0x280] sm:$0xff] %v312
                %v314 = vld [vmem:[%s150 + $0x4c8] sm:$0xff]
                %315 = vst [vmem:[%s151 + $0x288] sm:$0xff] %v314
                %v316 = vld [vmem:[%s150 + $0x4d0] sm:$0xff]
                %317 = vst [vmem:[%s151 + $0x290] sm:$0xff] %v316
                %v318 = vld [vmem:[%s150 + $0x4d8] sm:$0xff]
                %319 = vst [vmem:[%s151 + $0x298] sm:$0xff] %v318
                %v320 = vld [vmem:[%s150 + $0x4e0] sm:$0xff]
                %321 = vst [vmem:[%s151 + $0x2a0] sm:$0xff] %v320
                %v322 = vld [vmem:[%s150 + $0x4e8] sm:$0xff]
                %323 = vst [vmem:[%s151 + $0x2a8] sm:$0xff] %v322
                %v324 = vld [vmem:[%s150 + $0x4f0] sm:$0xff]
                %325 = vst [vmem:[%s151 + $0x2b0] sm:$0xff] %v324
                %v326 = vld [vmem:[%s150 + $0x4f8] sm:$0xff]
                %327 = vst [vmem:[%s151 + $0x2b8] sm:$0xff] %v326
                %v328 = vld [vmem:[%s150 + $0x500] sm:$0xff]
                %329 = vst [vmem:[%s151 + $0x2c0] sm:$0xff] %v328
                %v330 = vld [vmem:[%s150 + $0x508] sm:$0xff]
                %331 = vst [vmem:[%s151 + $0x2c8] sm:$0xff] %v330
                %v332 = vld [vmem:[%s150 + $0x5a0] sm:$0xff]
                %333 = vst [vmem:[%s151 + $0x2d0] sm:$0xff] %v332
                %v334 = vld [vmem:[%s150 + $0x5a8] sm:$0xff]
                %335 = vst [vmem:[%s151 + $0x2d8] sm:$0xff] %v334
                %v336 = vld [vmem:[%s150 + $0x5b0] sm:$0xff]
                %337 = vst [vmem:[%s151 + $0x2e0] sm:$0xff] %v336
                %v338 = vld [vmem:[%s150 + $0x5b8] sm:$0xff]
                %339 = vst [vmem:[%s151 + $0x2e8] sm:$0xff] %v338
                %v340 = vld [vmem:[%s150 + $0x5c0] sm:$0xff]
                %341 = vst [vmem:[%s151 + $0x2f0] sm:$0xff] %v340
                %v342 = vld [vmem:[%s150 + $0x5c8] sm:$0xff]
                %343 = vst [vmem:[%s151 + $0x2f8] sm:$0xff] %v342
                %v344 = vld [vmem:[%s150 + $0x5d0] sm:$0xff]
                %345 = vst [vmem:[%s151 + $0x300] sm:$0xff] %v344
                %v346 = vld [vmem:[%s150 + $0x5d8] sm:$0xff]
                %347 = vst [vmem:[%s151 + $0x308] sm:$0xff] %v346
                %v348 = vld [vmem:[%s150 + $0x5e0] sm:$0xff]
                %349 = vst [vmem:[%s151 + $0x310] sm:$0xff] %v348
                %v350 = vld [vmem:[%s150 + $0x5e8] sm:$0xff]
                %351 = vst [vmem:[%s151 + $0x318] sm:$0xff] %v350
                %v352 = vld [vmem:[%s150 + $0x5f0] sm:$0xff]
                %353 = vst [vmem:[%s151 + $0x320] sm:$0xff] %v352
                %v354 = vld [vmem:[%s150 + $0x5f8] sm:$0xff]
                %355 = vst [vmem:[%s151 + $0x328] sm:$0xff] %v354
                %v356 = vld [vmem:[%s150 + $0x600] sm:$0xff]
                %357 = vst [vmem:[%s151 + $0x330] sm:$0xff] %v356
                %v358 = vld [vmem:[%s150 + $0x608] sm:$0xff]
                %359 = vst [vmem:[%s151 + $0x338] sm:$0xff] %v358
                %v360 = vld [vmem:[%s150 + $0x610] sm:$0xff]
                %361 = vst [vmem:[%s151 + $0x340] sm:$0xff] %v360
                %v362 = vld [vmem:[%s150 + $0x618] sm:$0xff]
                %363 = vst [vmem:[%s151 + $0x348] sm:$0xff] %v362
                %v364 = vld [vmem:[%s150 + $0x620] sm:$0xff]
                %365 = vst [vmem:[%s151 + $0x350] sm:$0xff] %v364
                %v366 = vld [vmem:[%s150 + $0x628] sm:$0xff]
                %367 = vst [vmem:[%s151 + $0x358] sm:$0xff] %v366
              $region37: #{depthwise_conv2d_s2.1} parent=31 // loop_footer
                %s149 = sadd.s32 1, %s145
              $region38: #{depthwise_conv2d_s2.1} parent=31 // loop_footer_branch
                %144 = sbr.rel target = $region34
              $region39: #{depthwise_conv2d_s2.1} parent=31 // loop_exit
                _
            $region32: #{depthwise_conv2d_s2.1} parent=27 // pred_fallthru
              _
            // Predicated region
            $region40: #{depthwise_conv2d_s2.1} parent=27 // pred_check
              _
            $region41: #{depthwise_conv2d_s2.1} parent=27 // pred_check_branch
              %369 = sbr.rel target = $region43
            $region42: #{depthwise_conv2d_s2.1} parent=27 // pred_region
              _
            $region43: #{depthwise_conv2d_s2.1} parent=27 // pred_fallthru
              _
          $region28: #{depthwise_conv2d_s2.1} parent=23 // pred_fallthru
            _
          %370 = vnop
        $region24: #{depthwise_conv2d_s2.1} parent=19 // pred_fallthru
          _
        // Predicated region
        $region44: #{depthwise_conv2d_s2.1} parent=19 // pred_check
          %p371 = pneg %p55
        $region45: #{depthwise_conv2d_s2.1} parent=19 // pred_check_branch
          %373 = sbr.rel (%p371) target = $region47
        $region46: #{depthwise_conv2d_s2.1} parent=19 // pred_region
          %p374 = scmp.lt.s32.totalorder %s9, 1
          %s375 = scalar_select %p374, %s9, 1
          %s376 = smul.addr %s375, 18
          %s377 = smul.addr %s376, 4
          %s378 = scalar_lea.vmem %s1, %s377
        $region47: #{depthwise_conv2d_s2.1} parent=19 // pred_fallthru
          _
      $region20: #{depthwise_conv2d_s2.1} parent=5 // pred_fallthru
        _
      %p379 = scmp.le.s32.totalorder 1, %s9
      %p380 = scmp.lt.s32.totalorder %s9, 3
      %p381 = pnand %p379, %p380
      %p382 = pneg %p381
      // Predicated region
      $region48: #{depthwise_conv2d_s2.1} parent=5 // pred_check
        _
      $region49: #{depthwise_conv2d_s2.1} parent=5 // pred_check_branch
        %384 = sbr.rel (%p381) target = $region51
      $region50: #{depthwise_conv2d_s2.1} parent=5 // pred_region
        %s385 = ssub.s32 %s9, 1
        %s386 = sand.u32 %s22, 1
        %s387 = sand.u32 %s22, 1
        %s388 = smul.addr %s387, 864
        %s389 = scalar_lea.vmem [#allocation2], %s388
        // Predicated region
        $region52: #{depthwise_conv2d_s2.1} parent=50 // pred_check
          %p390 = pneg %p35
        $region53: #{depthwise_conv2d_s2.1} parent=50 // pred_check_branch
          %392 = sbr.rel (%p390) target = $region55
        $region54: #{depthwise_conv2d_s2.1} parent=50 // pred_region
          _
        $region55: #{depthwise_conv2d_s2.1} parent=50 // pred_fallthru
          _
        %s393 = sand.u32 %s22, 1
        %s394 = sand.u32 %s22, 1
        %s395 = smul.addr %s394, 864
        %s396 = scalar_lea.vmem [#allocation2], %s395
        %p397 = pneg %p35
        %p398 = pneg %p32
        %p399 = scmp.lt.s32.totalorder %s14, 1
        %s400 = scalar_select %p399, %s14, 1
        %s401 = smul.addr %s400, 18
        %s402 = smul.addr %s401, 4
        %s403 = scalar_lea.vmem %s1, %s402
        %p404 = pneg %p61
        %p405 = pneg %p58
        %p406 = pneg %p82
        %p407 = pneg %p79
        %p408 = pneg %p108
        %p409 = pneg %p105
        %p410 = scmp.lt.s32.totalorder %s14, 1
        %s411 = scalar_select %p410, %s14, 1
        %s412 = smul.addr %s411, 18
        %s413 = smul.addr %s412, 8
        %s414 = scalar_lea.vmem %s3, %s413
        %p415 = scmp.lt.s32.totalorder %s14, 1
        %s416 = scalar_select %p415, %s14, 1
        %s417 = smul.addr %s416, 18
        %s418 = smul.addr %s417, 4
        %s419 = scalar_lea.vmem %s1, %s418
        %p420 = scmp.lt.s32.totalorder %s14, 1
        %s421 = scalar_select %p420, %s14, 1
        %s422 = smul.addr %s421, 18
        %s423 = smul.addr %s422, 8
        %s424 = scalar_lea.vmem %s3, %s423
        %v425 = vld [vmem:[%s389] sm:$0xff]
        %v426 = vld [vmem:[%s389 + $0x8] sm:$0xff]
        %v427 = vld [vmem:[%s389 + $0x10] sm:$0xff]
        %v428 = vld [vmem:[%s389 + $0x18] sm:$0xff]
        %v429 = vld [vmem:[%s389 + $0x20] sm:$0xff]
        %v430 = vld [vmem:[%s389 + $0x28] sm:$0xff]
        %v431 = vld [vmem:[%s389 + $0x30] sm:$0xff]
        %v432 = vld [vmem:[%s389 + $0x38] sm:$0xff]
        %v433 = vld [vmem:[%s389 + $0x40] sm:$0xff]
        %s434 = scalar_lea.vmem %s389, 144 [#allocation2]
        %v435 = vld [vmem:[%s434] sm:$0xff]
        %v436 = vld [vmem:[%s434 + $0x8] sm:$0xff]
        %v437 = vld [vmem:[%s434 + $0x10] sm:$0xff]
        %v438 = vld [vmem:[%s434 + $0x18] sm:$0xff]
        %v439 = vld [vmem:[%s434 + $0x20] sm:$0xff]
        %v440 = vld [vmem:[%s434 + $0x28] sm:$0xff]
        %v441 = vld [vmem:[%s434 + $0x30] sm:$0xff]
        %v442 = vld [vmem:[%s434 + $0x38] sm:$0xff]
        %v443 = vld [vmem:[%s434 + $0x40] sm:$0xff]
        %v444 = vld [vmem:[%s419] ss:$4 sm:$0xff]
        %s445 = scalar_lea.vmem %s419, 32
        %v446 = vld [vmem:[%s445] ss:$4 sm:$0x1]
        %v456 = vrot.slane %v425, 1
        %v457 = vrot.slane %v426, 1
        %v458 = vrot.slane %v427, 1
        %v459 = vrot.slane %v428, 1
        %v460 = vrot.slane %v429, 1
        %v461 = vrot.slane %v430, 1
        %v462 = vrot.slane %v431, 1
        %v463 = vrot.slane %v432, 1
        %v464 = vrot.slane %v433, 1
        %v476 = vlaneseq
        %v477 = vshrl.u32 %v476, 7
        %v478 = vsub.s32 0, %v477
        %v479 = vrot.slane %v444, %v478
        %v480 = vlaneseq
        %v481 = vshrl.u32 %v480, 7
        %v482 = vsub.s32 1, %v481
        %v483 = vrot.slane %v444, %v482
        %v484 = vlaneseq
        %v485 = vshrl.u32 %v484, 7
        %v486 = vsub.s32 2, %v485
        %v487 = vrot.slane %v444, %v486
        %v488 = vlaneseq
        %v489 = vshrl.u32 %v488, 7
        %v490 = vsub.s32 3, %v489
        %v491 = vrot.slane %v444, %v490
        %v492 = vlaneseq
        %v493 = vshrl.u32 %v492, 7
        %v494 = vsub.s32 4, %v493
        %v495 = vrot.slane %v444, %v494
        %v496 = vlaneseq
        %v497 = vshrl.u32 %v496, 7
        %v498 = vsub.s32 5, %v497
        %v499 = vrot.slane %v444, %v498
        %v500 = vlaneseq
        %v501 = vshrl.u32 %v500, 7
        %v502 = vsub.s32 6, %v501
        %v503 = vrot.slane %v444, %v502
        %v504 = vlaneseq
        %v505 = vshrl.u32 %v504, 7
        %v506 = vsub.s32 7, %v505
        %v507 = vrot.slane %v444, %v506
        %v508 = vlaneseq
        %v509 = vshrl.u32 %v508, 7
        %v510 = vsub.s32 0, %v509
        %v511 = vrot.slane %v446, %v510
        %vm521 = vcmask 1046528
        %v522 = vsel %vm521, %v456, %v479
        %v523 = vsel %vm521, %v457, %v483
        %v524 = vsel %vm521, %v458, %v487
        %v525 = vsel %vm521, %v459, %v491
        %v526 = vsel %vm521, %v460, %v495
        %v527 = vsel %vm521, %v461, %v499
        %v528 = vsel %vm521, %v462, %v503
        %v529 = vsel %vm521, %v463, %v507
        %v530 = vsel %vm521, %v464, %v511
        %v531 = vld [vmem:[%s2] ss:$4 sm:$0xff]
        %s532 = scalar_lea.vmem %s2, 32
        %v533 = vld [vmem:[%s532] ss:$4 sm:$0x1]
        %s534 = scalar_lea.vmem %s2, 72
        %v535 = vld [vmem:[%s534] ss:$4 sm:$0xff]
        %s536 = scalar_lea.vmem %s534, 32
        %v537 = vld [vmem:[%s536] ss:$4 sm:$0x1]
        %s538 = scalar_lea.vmem %s2, 144
        %v539 = vld [vmem:[%s538] ss:$4 sm:$0xff]
        %s540 = scalar_lea.vmem %s538, 32
        %v541 = vld [vmem:[%s540] ss:$4 sm:$0x1]
        %v544 = vlaneseq
        %v545 = vshrl.u32 %v544, 7
        %v546 = vsub.s32 0, %v545
        %v547 = vrot.slane %v531, %v546
        %v548 = vlaneseq
        %v549 = vshrl.u32 %v548, 7
        %v550 = vsub.s32 1, %v549
        %v551 = vrot.slane %v531, %v550
        %v552 = vlaneseq
        %v553 = vshrl.u32 %v552, 7
        %v554 = vsub.s32 2, %v553
        %v555 = vrot.slane %v531, %v554
        %v556 = vlaneseq
        %v557 = vshrl.u32 %v556, 7
        %v558 = vsub.s32 3, %v557
        %v559 = vrot.slane %v531, %v558
        %v560 = vlaneseq
        %v561 = vshrl.u32 %v560, 7
        %v562 = vsub.s32 4, %v561
        %v563 = vrot.slane %v531, %v562
        %v564 = vlaneseq
        %v565 = vshrl.u32 %v564, 7
        %v566 = vsub.s32 5, %v565
        %v567 = vrot.slane %v531, %v566
        %v568 = vlaneseq
        %v569 = vshrl.u32 %v568, 7
        %v570 = vsub.s32 6, %v569
        %v571 = vrot.slane %v531, %v570
        %v572 = vlaneseq
        %v573 = vshrl.u32 %v572, 7
        %v574 = vsub.s32 7, %v573
        %v575 = vrot.slane %v531, %v574
        %v576 = vlaneseq
        %v577 = vshrl.u32 %v576, 7
        %v578 = vsub.s32 0, %v577
        %v579 = vrot.slane %v533, %v578
        %v589 = vmul.f32 %v425, %v547
        %v590 = vmul.f32 %v426, %v551
        %v591 = vmul.f32 %v427, %v555
        %v592 = vmul.f32 %v428, %v559
        %v593 = vmul.f32 %v429, %v563
        %v594 = vmul.f32 %v430, %v567
        %v595 = vmul.f32 %v431, %v571
        %v596 = vmul.f32 %v432, %v575
        %v597 = vmul.f32 %v433, %v579
        %v600 = vlaneseq
        %v601 = vshrl.u32 %v600, 7
        %v602 = vsub.s32 0, %v601
        %v603 = vrot.slane %v535, %v602
        %v604 = vlaneseq
        %v605 = vshrl.u32 %v604, 7
        %v606 = vsub.s32 1, %v605
        %v607 = vrot.slane %v535, %v606
        %v608 = vlaneseq
        %v609 = vshrl.u32 %v608, 7
        %v610 = vsub.s32 2, %v609
        %v611 = vrot.slane %v535, %v610
        %v612 = vlaneseq
        %v613 = vshrl.u32 %v612, 7
        %v614 = vsub.s32 3, %v613
        %v615 = vrot.slane %v535, %v614
        %v616 = vlaneseq
        %v617 = vshrl.u32 %v616, 7
        %v618 = vsub.s32 4, %v617
        %v619 = vrot.slane %v535, %v618
        %v620 = vlaneseq
        %v621 = vshrl.u32 %v620, 7
        %v622 = vsub.s32 5, %v621
        %v623 = vrot.slane %v535, %v622
        %v624 = vlaneseq
        %v625 = vshrl.u32 %v624, 7
        %v626 = vsub.s32 6, %v625
        %v627 = vrot.slane %v535, %v626
        %v628 = vlaneseq
        %v629 = vshrl.u32 %v628, 7
        %v630 = vsub.s32 7, %v629
        %v631 = vrot.slane %v535, %v630
        %v632 = vlaneseq
        %v633 = vshrl.u32 %v632, 7
        %v634 = vsub.s32 0, %v633
        %v635 = vrot.slane %v537, %v634
        %v645 = vmul.f32 %v435, %v603
        %v646 = vmul.f32 %v436, %v607
        %v647 = vmul.f32 %v437, %v611
        %v648 = vmul.f32 %v438, %v615
        %v649 = vmul.f32 %v439, %v619
        %v650 = vmul.f32 %v440, %v623
        %v651 = vmul.f32 %v441, %v627
        %v652 = vmul.f32 %v442, %v631
        %v653 = vmul.f32 %v443, %v635
        %v654 = vadd.f32 %v589, %v645
        %v655 = vadd.f32 %v590, %v646
        %v656 = vadd.f32 %v591, %v647
        %v657 = vadd.f32 %v592, %v648
        %v658 = vadd.f32 %v593, %v649
        %v659 = vadd.f32 %v594, %v650
        %v660 = vadd.f32 %v595, %v651
        %v661 = vadd.f32 %v596, %v652
        %v662 = vadd.f32 %v597, %v653
        %v665 = vlaneseq
        %v666 = vshrl.u32 %v665, 7
        %v667 = vsub.s32 0, %v666
        %v668 = vrot.slane %v539, %v667
        %v669 = vlaneseq
        %v670 = vshrl.u32 %v669, 7
        %v671 = vsub.s32 1, %v670
        %v672 = vrot.slane %v539, %v671
        %v673 = vlaneseq
        %v674 = vshrl.u32 %v673, 7
        %v675 = vsub.s32 2, %v674
        %v676 = vrot.slane %v539, %v675
        %v677 = vlaneseq
        %v678 = vshrl.u32 %v677, 7
        %v679 = vsub.s32 3, %v678
        %v680 = vrot.slane %v539, %v679
        %v681 = vlaneseq
        %v682 = vshrl.u32 %v681, 7
        %v683 = vsub.s32 4, %v682
        %v684 = vrot.slane %v539, %v683
        %v685 = vlaneseq
        %v686 = vshrl.u32 %v685, 7
        %v687 = vsub.s32 5, %v686
        %v688 = vrot.slane %v539, %v687
        %v689 = vlaneseq
        %v690 = vshrl.u32 %v689, 7
        %v691 = vsub.s32 6, %v690
        %v692 = vrot.slane %v539, %v691
        %v693 = vlaneseq
        %v694 = vshrl.u32 %v693, 7
        %v695 = vsub.s32 7, %v694
        %v696 = vrot.slane %v539, %v695
        %v697 = vlaneseq
        %v698 = vshrl.u32 %v697, 7
        %v699 = vsub.s32 0, %v698
        %v700 = vrot.slane %v541, %v699
        %v710 = vmul.f32 %v522, %v668
        %v711 = vmul.f32 %v523, %v672
        %v712 = vmul.f32 %v524, %v676
        %v713 = vmul.f32 %v525, %v680
        %v714 = vmul.f32 %v526, %v684
        %v715 = vmul.f32 %v527, %v688
        %v716 = vmul.f32 %v528, %v692
        %v717 = vmul.f32 %v529, %v696
        %v718 = vmul.f32 %v530, %v700
        %v719 = vadd.f32 %v654, %v710
        %v720 = vadd.f32 %v655, %v711
        %v721 = vadd.f32 %v656, %v712
        %v722 = vadd.f32 %v657, %v713
        %v723 = vadd.f32 %v658, %v714
        %v724 = vadd.f32 %v659, %v715
        %v725 = vadd.f32 %v660, %v716
        %v726 = vadd.f32 %v661, %v717
        %v727 = vadd.f32 %v662, %v718
        %s728 = scalar_lea.vmem %s389, 288 [#allocation2]
        %v729 = vld [vmem:[%s728] sm:$0xff]
        %v730 = vld [vmem:[%s728 + $0x8] sm:$0xff]
        %v731 = vld [vmem:[%s728 + $0x10] sm:$0xff]
        %v732 = vld [vmem:[%s728 + $0x18] sm:$0xff]
        %v733 = vld [vmem:[%s728 + $0x20] sm:$0xff]
        %v734 = vld [vmem:[%s728 + $0x28] sm:$0xff]
        %v735 = vld [vmem:[%s728 + $0x30] sm:$0xff]
        %v736 = vld [vmem:[%s728 + $0x38] sm:$0xff]
        %v737 = vld [vmem:[%s728 + $0x40] sm:$0xff]
        %s738 = scalar_lea.vmem %s389, 432 [#allocation2]
        %v739 = vld [vmem:[%s738] sm:$0xff]
        %v740 = vld [vmem:[%s738 + $0x8] sm:$0xff]
        %v741 = vld [vmem:[%s738 + $0x10] sm:$0xff]
        %v742 = vld [vmem:[%s738 + $0x18] sm:$0xff]
        %v743 = vld [vmem:[%s738 + $0x20] sm:$0xff]
        %v744 = vld [vmem:[%s738 + $0x28] sm:$0xff]
        %v745 = vld [vmem:[%s738 + $0x30] sm:$0xff]
        %v746 = vld [vmem:[%s738 + $0x38] sm:$0xff]
        %v747 = vld [vmem:[%s738 + $0x40] sm:$0xff]
        %s748 = scalar_lea.vmem %s419, 1
        %v749 = vld [vmem:[%s748] ss:$4 sm:$0xff]
        %s750 = scalar_lea.vmem %s419, 33
        %v751 = vld [vmem:[%s750] ss:$4 sm:$0x1]
        %v761 = vrot.slane %v729, 1
        %v762 = vrot.slane %v730, 1
        %v763 = vrot.slane %v731, 1
        %v764 = vrot.slane %v732, 1
        %v765 = vrot.slane %v733, 1
        %v766 = vrot.slane %v734, 1
        %v767 = vrot.slane %v735, 1
        %v768 = vrot.slane %v736, 1
        %v769 = vrot.slane %v737, 1
        %v781 = vlaneseq
        %v782 = vshrl.u32 %v781, 7
        %v783 = vsub.s32 0, %v782
        %v784 = vrot.slane %v749, %v783
        %v785 = vlaneseq
        %v786 = vshrl.u32 %v785, 7
        %v787 = vsub.s32 1, %v786
        %v788 = vrot.slane %v749, %v787
        %v789 = vlaneseq
        %v790 = vshrl.u32 %v789, 7
        %v791 = vsub.s32 2, %v790
        %v792 = vrot.slane %v749, %v791
        %v793 = vlaneseq
        %v794 = vshrl.u32 %v793, 7
        %v795 = vsub.s32 3, %v794
        %v796 = vrot.slane %v749, %v795
        %v797 = vlaneseq
        %v798 = vshrl.u32 %v797, 7
        %v799 = vsub.s32 4, %v798
        %v800 = vrot.slane %v749, %v799
        %v801 = vlaneseq
        %v802 = vshrl.u32 %v801, 7
        %v803 = vsub.s32 5, %v802
        %v804 = vrot.slane %v749, %v803
        %v805 = vlaneseq
        %v806 = vshrl.u32 %v805, 7
        %v807 = vsub.s32 6, %v806
        %v808 = vrot.slane %v749, %v807
        %v809 = vlaneseq
        %v810 = vshrl.u32 %v809, 7
        %v811 = vsub.s32 7, %v810
        %v812 = vrot.slane %v749, %v811
        %v813 = vlaneseq
        %v814 = vshrl.u32 %v813, 7
        %v815 = vsub.s32 0, %v814
        %v816 = vrot.slane %v751, %v815
        %v826 = vsel %vm521, %v761, %v784
        %v827 = vsel %vm521, %v762, %v788
        %v828 = vsel %vm521, %v763, %v792
        %v829 = vsel %vm521, %v764, %v796
        %v830 = vsel %vm521, %v765, %v800
        %v831 = vsel %vm521, %v766, %v804
        %v832 = vsel %vm521, %v767, %v808
        %v833 = vsel %vm521, %v768, %v812
        %v834 = vsel %vm521, %v769, %v816
        %s835 = scalar_lea.vmem %s2, 1
        %v836 = vld [vmem:[%s835] ss:$4 sm:$0xff]
        %s837 = scalar_lea.vmem %s2, 33
        %v838 = vld [vmem:[%s837] ss:$4 sm:$0x1]
        %s839 = scalar_lea.vmem %s534, 1
        %v840 = vld [vmem:[%s839] ss:$4 sm:$0xff]
        %s841 = scalar_lea.vmem %s534, 33
        %v842 = vld [vmem:[%s841] ss:$4 sm:$0x1]
        %s843 = scalar_lea.vmem %s538, 1
        %v844 = vld [vmem:[%s843] ss:$4 sm:$0xff]
        %s845 = scalar_lea.vmem %s538, 33
        %v846 = vld [vmem:[%s845] ss:$4 sm:$0x1]
        %v849 = vlaneseq
        %v850 = vshrl.u32 %v849, 7
        %v851 = vsub.s32 0, %v850
        %v852 = vrot.slane %v836, %v851
        %v853 = vlaneseq
        %v854 = vshrl.u32 %v853, 7
        %v855 = vsub.s32 1, %v854
        %v856 = vrot.slane %v836, %v855
        %v857 = vlaneseq
        %v858 = vshrl.u32 %v857, 7
        %v859 = vsub.s32 2, %v858
        %v860 = vrot.slane %v836, %v859
        %v861 = vlaneseq
        %v862 = vshrl.u32 %v861, 7
        %v863 = vsub.s32 3, %v862
        %v864 = vrot.slane %v836, %v863
        %v865 = vlaneseq
        %v866 = vshrl.u32 %v865, 7
        %v867 = vsub.s32 4, %v866
        %v868 = vrot.slane %v836, %v867
        %v869 = vlaneseq
        %v870 = vshrl.u32 %v869, 7
        %v871 = vsub.s32 5, %v870
        %v872 = vrot.slane %v836, %v871
        %v873 = vlaneseq
        %v874 = vshrl.u32 %v873, 7
        %v875 = vsub.s32 6, %v874
        %v876 = vrot.slane %v836, %v875
        %v877 = vlaneseq
        %v878 = vshrl.u32 %v877, 7
        %v879 = vsub.s32 7, %v878
        %v880 = vrot.slane %v836, %v879
        %v881 = vlaneseq
        %v882 = vshrl.u32 %v881, 7
        %v883 = vsub.s32 0, %v882
        %v884 = vrot.slane %v838, %v883
        %v894 = vmul.f32 %v729, %v852
        %v895 = vmul.f32 %v730, %v856
        %v896 = vmul.f32 %v731, %v860
        %v897 = vmul.f32 %v732, %v864
        %v898 = vmul.f32 %v733, %v868
        %v899 = vmul.f32 %v734, %v872
        %v900 = vmul.f32 %v735, %v876
        %v901 = vmul.f32 %v736, %v880
        %v902 = vmul.f32 %v737, %v884
        %v903 = vadd.f32 %v719, %v894
        %v904 = vadd.f32 %v720, %v895
        %v905 = vadd.f32 %v721, %v896
        %v906 = vadd.f32 %v722, %v897
        %v907 = vadd.f32 %v723, %v898
        %v908 = vadd.f32 %v724, %v899
        %v909 = vadd.f32 %v725, %v900
        %v910 = vadd.f32 %v726, %v901
        %v911 = vadd.f32 %v727, %v902
        %v914 = vlaneseq
        %v915 = vshrl.u32 %v914, 7
        %v916 = vsub.s32 0, %v915
        %v917 = vrot.slane %v840, %v916
        %v918 = vlaneseq
        %v919 = vshrl.u32 %v918, 7
        %v920 = vsub.s32 1, %v919
        %v921 = vrot.slane %v840, %v920
        %v922 = vlaneseq
        %v923 = vshrl.u32 %v922, 7
        %v924 = vsub.s32 2, %v923
        %v925 = vrot.slane %v840, %v924
        %v926 = vlaneseq
        %v927 = vshrl.u32 %v926, 7
        %v928 = vsub.s32 3, %v927
        %v929 = vrot.slane %v840, %v928
        %v930 = vlaneseq
        %v931 = vshrl.u32 %v930, 7
        %v932 = vsub.s32 4, %v931
        %v933 = vrot.slane %v840, %v932
        %v934 = vlaneseq
        %v935 = vshrl.u32 %v934, 7
        %v936 = vsub.s32 5, %v935
        %v937 = vrot.slane %v840, %v936
        %v938 = vlaneseq
        %v939 = vshrl.u32 %v938, 7
        %v940 = vsub.s32 6, %v939
        %v941 = vrot.slane %v840, %v940
        %v942 = vlaneseq
        %v943 = vshrl.u32 %v942, 7
        %v944 = vsub.s32 7, %v943
        %v945 = vrot.slane %v840, %v944
        %v946 = vlaneseq
        %v947 = vshrl.u32 %v946, 7
        %v948 = vsub.s32 0, %v947
        %v949 = vrot.slane %v842, %v948
        %v959 = vmul.f32 %v739, %v917
        %v960 = vmul.f32 %v740, %v921
        %v961 = vmul.f32 %v741, %v925
        %v962 = vmul.f32 %v742, %v929
        %v963 = vmul.f32 %v743, %v933
        %v964 = vmul.f32 %v744, %v937
        %v965 = vmul.f32 %v745, %v941
        %v966 = vmul.f32 %v746, %v945
        %v967 = vmul.f32 %v747, %v949
        %v968 = vadd.f32 %v903, %v959
        %v969 = vadd.f32 %v904, %v960
        %v970 = vadd.f32 %v905, %v961
        %v971 = vadd.f32 %v906, %v962
        %v972 = vadd.f32 %v907, %v963
        %v973 = vadd.f32 %v908, %v964
        %v974 = vadd.f32 %v909, %v965
        %v975 = vadd.f32 %v910, %v966
        %v976 = vadd.f32 %v911, %v967
        %v979 = vlaneseq
        %v980 = vshrl.u32 %v979, 7
        %v981 = vsub.s32 0, %v980
        %v982 = vrot.slane %v844, %v981
        %v983 = vlaneseq
        %v984 = vshrl.u32 %v983, 7
        %v985 = vsub.s32 1, %v984
        %v986 = vrot.slane %v844, %v985
        %v987 = vlaneseq
        %v988 = vshrl.u32 %v987, 7
        %v989 = vsub.s32 2, %v988
        %v990 = vrot.slane %v844, %v989
        %v991 = vlaneseq
        %v992 = vshrl.u32 %v991, 7
        %v993 = vsub.s32 3, %v992
        %v994 = vrot.slane %v844, %v993
        %v995 = vlaneseq
        %v996 = vshrl.u32 %v995, 7
        %v997 = vsub.s32 4, %v996
        %v998 = vrot.slane %v844, %v997
        %v999 = vlaneseq
        %v1000 = vshrl.u32 %v999, 7
        %v1001 = vsub.s32 5, %v1000
        %v1002 = vrot.slane %v844, %v1001
        %v1003 = vlaneseq
        %v1004 = vshrl.u32 %v1003, 7
        %v1005 = vsub.s32 6, %v1004
        %v1006 = vrot.slane %v844, %v1005
        %v1007 = vlaneseq
        %v1008 = vshrl.u32 %v1007, 7
        %v1009 = vsub.s32 7, %v1008
        %v1010 = vrot.slane %v844, %v1009
        %v1011 = vlaneseq
        %v1012 = vshrl.u32 %v1011, 7
        %v1013 = vsub.s32 0, %v1012
        %v1014 = vrot.slane %v846, %v1013
        %v1024 = vmul.f32 %v826, %v982
        %v1025 = vmul.f32 %v827, %v986
        %v1026 = vmul.f32 %v828, %v990
        %v1027 = vmul.f32 %v829, %v994
        %v1028 = vmul.f32 %v830, %v998
        %v1029 = vmul.f32 %v831, %v1002
        %v1030 = vmul.f32 %v832, %v1006
        %v1031 = vmul.f32 %v833, %v1010
        %v1032 = vmul.f32 %v834, %v1014
        %v1033 = vadd.f32 %v968, %v1024
        %v1034 = vadd.f32 %v969, %v1025
        %v1035 = vadd.f32 %v970, %v1026
        %v1036 = vadd.f32 %v971, %v1027
        %v1037 = vadd.f32 %v972, %v1028
        %v1038 = vadd.f32 %v973, %v1029
        %v1039 = vadd.f32 %v974, %v1030
        %v1040 = vadd.f32 %v975, %v1031
        %v1041 = vadd.f32 %v976, %v1032
        %s1042 = scalar_lea.vmem %s389, 576 [#allocation2]
        %v1043 = vld [vmem:[%s1042] sm:$0xff]
        %v1044 = vld [vmem:[%s1042 + $0x8] sm:$0xff]
        %v1045 = vld [vmem:[%s1042 + $0x10] sm:$0xff]
        %v1046 = vld [vmem:[%s1042 + $0x18] sm:$0xff]
        %v1047 = vld [vmem:[%s1042 + $0x20] sm:$0xff]
        %v1048 = vld [vmem:[%s1042 + $0x28] sm:$0xff]
        %v1049 = vld [vmem:[%s1042 + $0x30] sm:$0xff]
        %v1050 = vld [vmem:[%s1042 + $0x38] sm:$0xff]
        %v1051 = vld [vmem:[%s1042 + $0x40] sm:$0xff]
        %s1052 = scalar_lea.vmem %s389, 720 [#allocation2]
        %v1053 = vld [vmem:[%s1052] sm:$0xff]
        %v1054 = vld [vmem:[%s1052 + $0x8] sm:$0xff]
        %v1055 = vld [vmem:[%s1052 + $0x10] sm:$0xff]
        %v1056 = vld [vmem:[%s1052 + $0x18] sm:$0xff]
        %v1057 = vld [vmem:[%s1052 + $0x20] sm:$0xff]
        %v1058 = vld [vmem:[%s1052 + $0x28] sm:$0xff]
        %v1059 = vld [vmem:[%s1052 + $0x30] sm:$0xff]
        %v1060 = vld [vmem:[%s1052 + $0x38] sm:$0xff]
        %v1061 = vld [vmem:[%s1052 + $0x40] sm:$0xff]
        %s1062 = scalar_lea.vmem %s419, 2
        %v1063 = vld [vmem:[%s1062] ss:$4 sm:$0xff]
        %s1064 = scalar_lea.vmem %s419, 34
        %v1065 = vld [vmem:[%s1064] ss:$4 sm:$0x1]
        %v1075 = vrot.slane %v1043, 1
        %v1076 = vrot.slane %v1044, 1
        %v1077 = vrot.slane %v1045, 1
        %v1078 = vrot.slane %v1046, 1
        %v1079 = vrot.slane %v1047, 1
        %v1080 = vrot.slane %v1048, 1
        %v1081 = vrot.slane %v1049, 1
        %v1082 = vrot.slane %v1050, 1
        %v1083 = vrot.slane %v1051, 1
        %v1095 = vlaneseq
        %v1096 = vshrl.u32 %v1095, 7
        %v1097 = vsub.s32 0, %v1096
        %v1098 = vrot.slane %v1063, %v1097
        %v1099 = vlaneseq
        %v1100 = vshrl.u32 %v1099, 7
        %v1101 = vsub.s32 1, %v1100
        %v1102 = vrot.slane %v1063, %v1101
        %v1103 = vlaneseq
        %v1104 = vshrl.u32 %v1103, 7
        %v1105 = vsub.s32 2, %v1104
        %v1106 = vrot.slane %v1063, %v1105
        %v1107 = vlaneseq
        %v1108 = vshrl.u32 %v1107, 7
        %v1109 = vsub.s32 3, %v1108
        %v1110 = vrot.slane %v1063, %v1109
        %v1111 = vlaneseq
        %v1112 = vshrl.u32 %v1111, 7
        %v1113 = vsub.s32 4, %v1112
        %v1114 = vrot.slane %v1063, %v1113
        %v1115 = vlaneseq
        %v1116 = vshrl.u32 %v1115, 7
        %v1117 = vsub.s32 5, %v1116
        %v1118 = vrot.slane %v1063, %v1117
        %v1119 = vlaneseq
        %v1120 = vshrl.u32 %v1119, 7
        %v1121 = vsub.s32 6, %v1120
        %v1122 = vrot.slane %v1063, %v1121
        %v1123 = vlaneseq
        %v1124 = vshrl.u32 %v1123, 7
        %v1125 = vsub.s32 7, %v1124
        %v1126 = vrot.slane %v1063, %v1125
        %v1127 = vlaneseq
        %v1128 = vshrl.u32 %v1127, 7
        %v1129 = vsub.s32 0, %v1128
        %v1130 = vrot.slane %v1065, %v1129
        %v1140 = vsel %vm521, %v1075, %v1098
        %v1141 = vsel %vm521, %v1076, %v1102
        %v1142 = vsel %vm521, %v1077, %v1106
        %v1143 = vsel %vm521, %v1078, %v1110
        %v1144 = vsel %vm521, %v1079, %v1114
        %v1145 = vsel %vm521, %v1080, %v1118
        %v1146 = vsel %vm521, %v1081, %v1122
        %v1147 = vsel %vm521, %v1082, %v1126
        %v1148 = vsel %vm521, %v1083, %v1130
        %s1149 = scalar_lea.vmem %s2, 2
        %v1150 = vld [vmem:[%s1149] ss:$4 sm:$0xff]
        %s1151 = scalar_lea.vmem %s2, 34
        %v1152 = vld [vmem:[%s1151] ss:$4 sm:$0x1]
        %s1153 = scalar_lea.vmem %s534, 2
        %v1154 = vld [vmem:[%s1153] ss:$4 sm:$0xff]
        %s1155 = scalar_lea.vmem %s534, 34
        %v1156 = vld [vmem:[%s1155] ss:$4 sm:$0x1]
        %s1157 = scalar_lea.vmem %s538, 2
        %v1158 = vld [vmem:[%s1157] ss:$4 sm:$0xff]
        %s1159 = scalar_lea.vmem %s538, 34
        %v1160 = vld [vmem:[%s1159] ss:$4 sm:$0x1]
        %v1163 = vlaneseq
        %v1164 = vshrl.u32 %v1163, 7
        %v1165 = vsub.s32 0, %v1164
        %v1166 = vrot.slane %v1150, %v1165
        %v1167 = vlaneseq
        %v1168 = vshrl.u32 %v1167, 7
        %v1169 = vsub.s32 1, %v1168
        %v1170 = vrot.slane %v1150, %v1169
        %v1171 = vlaneseq
        %v1172 = vshrl.u32 %v1171, 7
        %v1173 = vsub.s32 2, %v1172
        %v1174 = vrot.slane %v1150, %v1173
        %v1175 = vlaneseq
        %v1176 = vshrl.u32 %v1175, 7
        %v1177 = vsub.s32 3, %v1176
        %v1178 = vrot.slane %v1150, %v1177
        %v1179 = vlaneseq
        %v1180 = vshrl.u32 %v1179, 7
        %v1181 = vsub.s32 4, %v1180
        %v1182 = vrot.slane %v1150, %v1181
        %v1183 = vlaneseq
        %v1184 = vshrl.u32 %v1183, 7
        %v1185 = vsub.s32 5, %v1184
        %v1186 = vrot.slane %v1150, %v1185
        %v1187 = vlaneseq
        %v1188 = vshrl.u32 %v1187, 7
        %v1189 = vsub.s32 6, %v1188
        %v1190 = vrot.slane %v1150, %v1189
        %v1191 = vlaneseq
        %v1192 = vshrl.u32 %v1191, 7
        %v1193 = vsub.s32 7, %v1192
        %v1194 = vrot.slane %v1150, %v1193
        %v1195 = vlaneseq
        %v1196 = vshrl.u32 %v1195, 7
        %v1197 = vsub.s32 0, %v1196
        %v1198 = vrot.slane %v1152, %v1197
        %v1208 = vmul.f32 %v1043, %v1166
        %v1209 = vmul.f32 %v1044, %v1170
        %v1210 = vmul.f32 %v1045, %v1174
        %v1211 = vmul.f32 %v1046, %v1178
        %v1212 = vmul.f32 %v1047, %v1182
        %v1213 = vmul.f32 %v1048, %v1186
        %v1214 = vmul.f32 %v1049, %v1190
        %v1215 = vmul.f32 %v1050, %v1194
        %v1216 = vmul.f32 %v1051, %v1198
        %v1217 = vadd.f32 %v1033, %v1208
        %v1218 = vadd.f32 %v1034, %v1209
        %v1219 = vadd.f32 %v1035, %v1210
        %v1220 = vadd.f32 %v1036, %v1211
        %v1221 = vadd.f32 %v1037, %v1212
        %v1222 = vadd.f32 %v1038, %v1213
        %v1223 = vadd.f32 %v1039, %v1214
        %v1224 = vadd.f32 %v1040, %v1215
        %v1225 = vadd.f32 %v1041, %v1216
        %v1228 = vlaneseq
        %v1229 = vshrl.u32 %v1228, 7
        %v1230 = vsub.s32 0, %v1229
        %v1231 = vrot.slane %v1154, %v1230
        %v1232 = vlaneseq
        %v1233 = vshrl.u32 %v1232, 7
        %v1234 = vsub.s32 1, %v1233
        %v1235 = vrot.slane %v1154, %v1234
        %v1236 = vlaneseq
        %v1237 = vshrl.u32 %v1236, 7
        %v1238 = vsub.s32 2, %v1237
        %v1239 = vrot.slane %v1154, %v1238
        %v1240 = vlaneseq
        %v1241 = vshrl.u32 %v1240, 7
        %v1242 = vsub.s32 3, %v1241
        %v1243 = vrot.slane %v1154, %v1242
        %v1244 = vlaneseq
        %v1245 = vshrl.u32 %v1244, 7
        %v1246 = vsub.s32 4, %v1245
        %v1247 = vrot.slane %v1154, %v1246
        %v1248 = vlaneseq
        %v1249 = vshrl.u32 %v1248, 7
        %v1250 = vsub.s32 5, %v1249
        %v1251 = vrot.slane %v1154, %v1250
        %v1252 = vlaneseq
        %v1253 = vshrl.u32 %v1252, 7
        %v1254 = vsub.s32 6, %v1253
        %v1255 = vrot.slane %v1154, %v1254
        %v1256 = vlaneseq
        %v1257 = vshrl.u32 %v1256, 7
        %v1258 = vsub.s32 7, %v1257
        %v1259 = vrot.slane %v1154, %v1258
        %v1260 = vlaneseq
        %v1261 = vshrl.u32 %v1260, 7
        %v1262 = vsub.s32 0, %v1261
        %v1263 = vrot.slane %v1156, %v1262
        %v1273 = vmul.f32 %v1053, %v1231
        %v1274 = vmul.f32 %v1054, %v1235
        %v1275 = vmul.f32 %v1055, %v1239
        %v1276 = vmul.f32 %v1056, %v1243
        %v1277 = vmul.f32 %v1057, %v1247
        %v1278 = vmul.f32 %v1058, %v1251
        %v1279 = vmul.f32 %v1059, %v1255
        %v1280 = vmul.f32 %v1060, %v1259
        %v1281 = vmul.f32 %v1061, %v1263
        %v1282 = vadd.f32 %v1217, %v1273
        %v1283 = vadd.f32 %v1218, %v1274
        %v1284 = vadd.f32 %v1219, %v1275
        %v1285 = vadd.f32 %v1220, %v1276
        %v1286 = vadd.f32 %v1221, %v1277
        %v1287 = vadd.f32 %v1222, %v1278
        %v1288 = vadd.f32 %v1223, %v1279
        %v1289 = vadd.f32 %v1224, %v1280
        %v1290 = vadd.f32 %v1225, %v1281
        %v1293 = vlaneseq
        %v1294 = vshrl.u32 %v1293, 7
        %v1295 = vsub.s32 0, %v1294
        %v1296 = vrot.slane %v1158, %v1295
        %v1297 = vlaneseq
        %v1298 = vshrl.u32 %v1297, 7
        %v1299 = vsub.s32 1, %v1298
        %v1300 = vrot.slane %v1158, %v1299
        %v1301 = vlaneseq
        %v1302 = vshrl.u32 %v1301, 7
        %v1303 = vsub.s32 2, %v1302
        %v1304 = vrot.slane %v1158, %v1303
        %v1305 = vlaneseq
        %v1306 = vshrl.u32 %v1305, 7
        %v1307 = vsub.s32 3, %v1306
        %v1308 = vrot.slane %v1158, %v1307
        %v1309 = vlaneseq
        %v1310 = vshrl.u32 %v1309, 7
        %v1311 = vsub.s32 4, %v1310
        %v1312 = vrot.slane %v1158, %v1311
        %v1313 = vlaneseq
        %v1314 = vshrl.u32 %v1313, 7
        %v1315 = vsub.s32 5, %v1314
        %v1316 = vrot.slane %v1158, %v1315
        %v1317 = vlaneseq
        %v1318 = vshrl.u32 %v1317, 7
        %v1319 = vsub.s32 6, %v1318
        %v1320 = vrot.slane %v1158, %v1319
        %v1321 = vlaneseq
        %v1322 = vshrl.u32 %v1321, 7
        %v1323 = vsub.s32 7, %v1322
        %v1324 = vrot.slane %v1158, %v1323
        %v1325 = vlaneseq
        %v1326 = vshrl.u32 %v1325, 7
        %v1327 = vsub.s32 0, %v1326
        %v1328 = vrot.slane %v1160, %v1327
        %v1338 = vmul.f32 %v1140, %v1296
        %v1339 = vmul.f32 %v1141, %v1300
        %v1340 = vmul.f32 %v1142, %v1304
        %v1341 = vmul.f32 %v1143, %v1308
        %v1342 = vmul.f32 %v1144, %v1312
        %v1343 = vmul.f32 %v1145, %v1316
        %v1344 = vmul.f32 %v1146, %v1320
        %v1345 = vmul.f32 %v1147, %v1324
        %v1346 = vmul.f32 %v1148, %v1328
        %v1347 = vadd.f32 %v1282, %v1338
        %v1348 = vadd.f32 %v1283, %v1339
        %v1349 = vadd.f32 %v1284, %v1340
        %v1350 = vadd.f32 %v1285, %v1341
        %v1351 = vadd.f32 %v1286, %v1342
        %v1352 = vadd.f32 %v1287, %v1343
        %v1353 = vadd.f32 %v1288, %v1344
        %v1354 = vadd.f32 %v1289, %v1345
        %v1355 = vadd.f32 %v1290, %v1346
        %1356 = vst [vmem:[%s424] sm:$0xff] %v1347
        %1357 = vst [vmem:[%s424 + $0x8] sm:$0xff] %v1348
        %1358 = vst [vmem:[%s424 + $0x10] sm:$0xff] %v1349
        %1359 = vst [vmem:[%s424 + $0x18] sm:$0xff] %v1350
        %1360 = vst [vmem:[%s424 + $0x20] sm:$0xff] %v1351
        %1361 = vst [vmem:[%s424 + $0x28] sm:$0xff] %v1352
        %1362 = vst [vmem:[%s424 + $0x30] sm:$0xff] %v1353
        %1363 = vst [vmem:[%s424 + $0x38] sm:$0xff] %v1354
        %1364 = vst [vmem:[%s424 + $0x40] sm:$0xff] %v1355
        %v1365 = vld [vmem:[%s389 + $0x48] sm:$0xff]
        %v1366 = vld [vmem:[%s389 + $0x50] sm:$0xff]
        %v1367 = vld [vmem:[%s389 + $0x58] sm:$0xff]
        %v1368 = vld [vmem:[%s389 + $0x60] sm:$0xff]
        %v1369 = vld [vmem:[%s389 + $0x68] sm:$0xff]
        %v1370 = vld [vmem:[%s389 + $0x70] sm:$0xff]
        %v1371 = vld [vmem:[%s389 + $0x78] sm:$0xff]
        %v1372 = vld [vmem:[%s389 + $0x80] sm:$0xff]
        %v1373 = vld [vmem:[%s389 + $0x88] sm:$0xff]
        %v1374 = vld [vmem:[%s434 + $0x48] sm:$0xff]
        %v1375 = vld [vmem:[%s434 + $0x50] sm:$0xff]
        %v1376 = vld [vmem:[%s434 + $0x58] sm:$0xff]
        %v1377 = vld [vmem:[%s434 + $0x60] sm:$0xff]
        %v1378 = vld [vmem:[%s434 + $0x68] sm:$0xff]
        %v1379 = vld [vmem:[%s434 + $0x70] sm:$0xff]
        %v1380 = vld [vmem:[%s434 + $0x78] sm:$0xff]
        %v1381 = vld [vmem:[%s434 + $0x80] sm:$0xff]
        %v1382 = vld [vmem:[%s434 + $0x88] sm:$0xff]
        %s1383 = scalar_lea.vmem %s419, 36
        %v1384 = vld [vmem:[%s1383] ss:$4 sm:$0xff]
        %s1385 = scalar_lea.vmem %s419, 68
        %v1386 = vld [vmem:[%s1385] ss:$4 sm:$0x1]
        %v1396 = vrot.slane %v1365, 1
        %v1397 = vrot.slane %v1366, 1
        %v1398 = vrot.slane %v1367, 1
        %v1399 = vrot.slane %v1368, 1
        %v1400 = vrot.slane %v1369, 1
        %v1401 = vrot.slane %v1370, 1
        %v1402 = vrot.slane %v1371, 1
        %v1403 = vrot.slane %v1372, 1
        %v1404 = vrot.slane %v1373, 1
        %v1416 = vlaneseq
        %v1417 = vshrl.u32 %v1416, 7
        %v1418 = vsub.s32 0, %v1417
        %v1419 = vrot.slane %v1384, %v1418
        %v1420 = vlaneseq
        %v1421 = vshrl.u32 %v1420, 7
        %v1422 = vsub.s32 1, %v1421
        %v1423 = vrot.slane %v1384, %v1422
        %v1424 = vlaneseq
        %v1425 = vshrl.u32 %v1424, 7
        %v1426 = vsub.s32 2, %v1425
        %v1427 = vrot.slane %v1384, %v1426
        %v1428 = vlaneseq
        %v1429 = vshrl.u32 %v1428, 7
        %v1430 = vsub.s32 3, %v1429
        %v1431 = vrot.slane %v1384, %v1430
        %v1432 = vlaneseq
        %v1433 = vshrl.u32 %v1432, 7
        %v1434 = vsub.s32 4, %v1433
        %v1435 = vrot.slane %v1384, %v1434
        %v1436 = vlaneseq
        %v1437 = vshrl.u32 %v1436, 7
        %v1438 = vsub.s32 5, %v1437
        %v1439 = vrot.slane %v1384, %v1438
        %v1440 = vlaneseq
        %v1441 = vshrl.u32 %v1440, 7
        %v1442 = vsub.s32 6, %v1441
        %v1443 = vrot.slane %v1384, %v1442
        %v1444 = vlaneseq
        %v1445 = vshrl.u32 %v1444, 7
        %v1446 = vsub.s32 7, %v1445
        %v1447 = vrot.slane %v1384, %v1446
        %v1448 = vlaneseq
        %v1449 = vshrl.u32 %v1448, 7
        %v1450 = vsub.s32 0, %v1449
        %v1451 = vrot.slane %v1386, %v1450
        %v1461 = vsel %vm521, %v1396, %v1419
        %v1462 = vsel %vm521, %v1397, %v1423
        %v1463 = vsel %vm521, %v1398, %v1427
        %v1464 = vsel %vm521, %v1399, %v1431
        %v1465 = vsel %vm521, %v1400, %v1435
        %v1466 = vsel %vm521, %v1401, %v1439
        %v1467 = vsel %vm521, %v1402, %v1443
        %v1468 = vsel %vm521, %v1403, %v1447
        %v1469 = vsel %vm521, %v1404, %v1451
        %s1470 = scalar_lea.vmem %s2, 36
        %v1471 = vld [vmem:[%s1470] ss:$4 sm:$0xff]
        %s1472 = scalar_lea.vmem %s2, 68
        %v1473 = vld [vmem:[%s1472] ss:$4 sm:$0x1]
        %s1474 = scalar_lea.vmem %s534, 36
        %v1475 = vld [vmem:[%s1474] ss:$4 sm:$0xff]
        %s1476 = scalar_lea.vmem %s534, 68
        %v1477 = vld [vmem:[%s1476] ss:$4 sm:$0x1]
        %s1478 = scalar_lea.vmem %s538, 36
        %v1479 = vld [vmem:[%s1478] ss:$4 sm:$0xff]
        %s1480 = scalar_lea.vmem %s538, 68
        %v1481 = vld [vmem:[%s1480] ss:$4 sm:$0x1]
        %v1484 = vlaneseq
        %v1485 = vshrl.u32 %v1484, 7
        %v1486 = vsub.s32 0, %v1485
        %v1487 = vrot.slane %v1471, %v1486
        %v1488 = vlaneseq
        %v1489 = vshrl.u32 %v1488, 7
        %v1490 = vsub.s32 1, %v1489
        %v1491 = vrot.slane %v1471, %v1490
        %v1492 = vlaneseq
        %v1493 = vshrl.u32 %v1492, 7
        %v1494 = vsub.s32 2, %v1493
        %v1495 = vrot.slane %v1471, %v1494
        %v1496 = vlaneseq
        %v1497 = vshrl.u32 %v1496, 7
        %v1498 = vsub.s32 3, %v1497
        %v1499 = vrot.slane %v1471, %v1498
        %v1500 = vlaneseq
        %v1501 = vshrl.u32 %v1500, 7
        %v1502 = vsub.s32 4, %v1501
        %v1503 = vrot.slane %v1471, %v1502
        %v1504 = vlaneseq
        %v1505 = vshrl.u32 %v1504, 7
        %v1506 = vsub.s32 5, %v1505
        %v1507 = vrot.slane %v1471, %v1506
        %v1508 = vlaneseq
        %v1509 = vshrl.u32 %v1508, 7
        %v1510 = vsub.s32 6, %v1509
        %v1511 = vrot.slane %v1471, %v1510
        %v1512 = vlaneseq
        %v1513 = vshrl.u32 %v1512, 7
        %v1514 = vsub.s32 7, %v1513
        %v1515 = vrot.slane %v1471, %v1514
        %v1516 = vlaneseq
        %v1517 = vshrl.u32 %v1516, 7
        %v1518 = vsub.s32 0, %v1517
        %v1519 = vrot.slane %v1473, %v1518
        %v1529 = vmul.f32 %v1365, %v1487
        %v1530 = vmul.f32 %v1366, %v1491
        %v1531 = vmul.f32 %v1367, %v1495
        %v1532 = vmul.f32 %v1368, %v1499
        %v1533 = vmul.f32 %v1369, %v1503
        %v1534 = vmul.f32 %v1370, %v1507
        %v1535 = vmul.f32 %v1371, %v1511
        %v1536 = vmul.f32 %v1372, %v1515
        %v1537 = vmul.f32 %v1373, %v1519
        %v1540 = vlaneseq
        %v1541 = vshrl.u32 %v1540, 7
        %v1542 = vsub.s32 0, %v1541
        %v1543 = vrot.slane %v1475, %v1542
        %v1544 = vlaneseq
        %v1545 = vshrl.u32 %v1544, 7
        %v1546 = vsub.s32 1, %v1545
        %v1547 = vrot.slane %v1475, %v1546
        %v1548 = vlaneseq
        %v1549 = vshrl.u32 %v1548, 7
        %v1550 = vsub.s32 2, %v1549
        %v1551 = vrot.slane %v1475, %v1550
        %v1552 = vlaneseq
        %v1553 = vshrl.u32 %v1552, 7
        %v1554 = vsub.s32 3, %v1553
        %v1555 = vrot.slane %v1475, %v1554
        %v1556 = vlaneseq
        %v1557 = vshrl.u32 %v1556, 7
        %v1558 = vsub.s32 4, %v1557
        %v1559 = vrot.slane %v1475, %v1558
        %v1560 = vlaneseq
        %v1561 = vshrl.u32 %v1560, 7
        %v1562 = vsub.s32 5, %v1561
        %v1563 = vrot.slane %v1475, %v1562
        %v1564 = vlaneseq
        %v1565 = vshrl.u32 %v1564, 7
        %v1566 = vsub.s32 6, %v1565
        %v1567 = vrot.slane %v1475, %v1566
        %v1568 = vlaneseq
        %v1569 = vshrl.u32 %v1568, 7
        %v1570 = vsub.s32 7, %v1569
        %v1571 = vrot.slane %v1475, %v1570
        %v1572 = vlaneseq
        %v1573 = vshrl.u32 %v1572, 7
        %v1574 = vsub.s32 0, %v1573
        %v1575 = vrot.slane %v1477, %v1574
        %v1585 = vmul.f32 %v1374, %v1543
        %v1586 = vmul.f32 %v1375, %v1547
        %v1587 = vmul.f32 %v1376, %v1551
        %v1588 = vmul.f32 %v1377, %v1555
        %v1589 = vmul.f32 %v1378, %v1559
        %v1590 = vmul.f32 %v1379, %v1563
        %v1591 = vmul.f32 %v1380, %v1567
        %v1592 = vmul.f32 %v1381, %v1571
        %v1593 = vmul.f32 %v1382, %v1575
        %v1594 = vadd.f32 %v1529, %v1585
        %v1595 = vadd.f32 %v1530, %v1586
        %v1596 = vadd.f32 %v1531, %v1587
        %v1597 = vadd.f32 %v1532, %v1588
        %v1598 = vadd.f32 %v1533, %v1589
        %v1599 = vadd.f32 %v1534, %v1590
        %v1600 = vadd.f32 %v1535, %v1591
        %v1601 = vadd.f32 %v1536, %v1592
        %v1602 = vadd.f32 %v1537, %v1593
        %v1605 = vlaneseq
        %v1606 = vshrl.u32 %v1605, 7
        %v1607 = vsub.s32 0, %v1606
        %v1608 = vrot.slane %v1479, %v1607
        %v1609 = vlaneseq
        %v1610 = vshrl.u32 %v1609, 7
        %v1611 = vsub.s32 1, %v1610
        %v1612 = vrot.slane %v1479, %v1611
        %v1613 = vlaneseq
        %v1614 = vshrl.u32 %v1613, 7
        %v1615 = vsub.s32 2, %v1614
        %v1616 = vrot.slane %v1479, %v1615
        %v1617 = vlaneseq
        %v1618 = vshrl.u32 %v1617, 7
        %v1619 = vsub.s32 3, %v1618
        %v1620 = vrot.slane %v1479, %v1619
        %v1621 = vlaneseq
        %v1622 = vshrl.u32 %v1621, 7
        %v1623 = vsub.s32 4, %v1622
        %v1624 = vrot.slane %v1479, %v1623
        %v1625 = vlaneseq
        %v1626 = vshrl.u32 %v1625, 7
        %v1627 = vsub.s32 5, %v1626
        %v1628 = vrot.slane %v1479, %v1627
        %v1629 = vlaneseq
        %v1630 = vshrl.u32 %v1629, 7
        %v1631 = vsub.s32 6, %v1630
        %v1632 = vrot.slane %v1479, %v1631
        %v1633 = vlaneseq
        %v1634 = vshrl.u32 %v1633, 7
        %v1635 = vsub.s32 7, %v1634
        %v1636 = vrot.slane %v1479, %v1635
        %v1637 = vlaneseq
        %v1638 = vshrl.u32 %v1637, 7
        %v1639 = vsub.s32 0, %v1638
        %v1640 = vrot.slane %v1481, %v1639
        %v1650 = vmul.f32 %v1461, %v1608
        %v1651 = vmul.f32 %v1462, %v1612
        %v1652 = vmul.f32 %v1463, %v1616
        %v1653 = vmul.f32 %v1464, %v1620
        %v1654 = vmul.f32 %v1465, %v1624
        %v1655 = vmul.f32 %v1466, %v1628
        %v1656 = vmul.f32 %v1467, %v1632
        %v1657 = vmul.f32 %v1468, %v1636
        %v1658 = vmul.f32 %v1469, %v1640
        %v1659 = vadd.f32 %v1594, %v1650
        %v1660 = vadd.f32 %v1595, %v1651
        %v1661 = vadd.f32 %v1596, %v1652
        %v1662 = vadd.f32 %v1597, %v1653
        %v1663 = vadd.f32 %v1598, %v1654
        %v1664 = vadd.f32 %v1599, %v1655
        %v1665 = vadd.f32 %v1600, %v1656
        %v1666 = vadd.f32 %v1601, %v1657
        %v1667 = vadd.f32 %v1602, %v1658
        %v1668 = vld [vmem:[%s728 + $0x48] sm:$0xff]
        %v1669 = vld [vmem:[%s728 + $0x50] sm:$0xff]
        %v1670 = vld [vmem:[%s728 + $0x58] sm:$0xff]
        %v1671 = vld [vmem:[%s728 + $0x60] sm:$0xff]
        %v1672 = vld [vmem:[%s728 + $0x68] sm:$0xff]
        %v1673 = vld [vmem:[%s728 + $0x70] sm:$0xff]
        %v1674 = vld [vmem:[%s728 + $0x78] sm:$0xff]
        %v1675 = vld [vmem:[%s728 + $0x80] sm:$0xff]
        %v1676 = vld [vmem:[%s728 + $0x88] sm:$0xff]
        %v1677 = vld [vmem:[%s738 + $0x48] sm:$0xff]
        %v1678 = vld [vmem:[%s738 + $0x50] sm:$0xff]
        %v1679 = vld [vmem:[%s738 + $0x58] sm:$0xff]
        %v1680 = vld [vmem:[%s738 + $0x60] sm:$0xff]
        %v1681 = vld [vmem:[%s738 + $0x68] sm:$0xff]
        %v1682 = vld [vmem:[%s738 + $0x70] sm:$0xff]
        %v1683 = vld [vmem:[%s738 + $0x78] sm:$0xff]
        %v1684 = vld [vmem:[%s738 + $0x80] sm:$0xff]
        %v1685 = vld [vmem:[%s738 + $0x88] sm:$0xff]
        %s1686 = scalar_lea.vmem %s419, 37
        %v1687 = vld [vmem:[%s1686] ss:$4 sm:$0xff]
        %s1688 = scalar_lea.vmem %s419, 69
        %v1689 = vld [vmem:[%s1688] ss:$4 sm:$0x1]
        %v1699 = vrot.slane %v1668, 1
        %v1700 = vrot.slane %v1669, 1
        %v1701 = vrot.slane %v1670, 1
        %v1702 = vrot.slane %v1671, 1
        %v1703 = vrot.slane %v1672, 1
        %v1704 = vrot.slane %v1673, 1
        %v1705 = vrot.slane %v1674, 1
        %v1706 = vrot.slane %v1675, 1
        %v1707 = vrot.slane %v1676, 1
        %v1719 = vlaneseq
        %v1720 = vshrl.u32 %v1719, 7
        %v1721 = vsub.s32 0, %v1720
        %v1722 = vrot.slane %v1687, %v1721
        %v1723 = vlaneseq
        %v1724 = vshrl.u32 %v1723, 7
        %v1725 = vsub.s32 1, %v1724
        %v1726 = vrot.slane %v1687, %v1725
        %v1727 = vlaneseq
        %v1728 = vshrl.u32 %v1727, 7
        %v1729 = vsub.s32 2, %v1728
        %v1730 = vrot.slane %v1687, %v1729
        %v1731 = vlaneseq
        %v1732 = vshrl.u32 %v1731, 7
        %v1733 = vsub.s32 3, %v1732
        %v1734 = vrot.slane %v1687, %v1733
        %v1735 = vlaneseq
        %v1736 = vshrl.u32 %v1735, 7
        %v1737 = vsub.s32 4, %v1736
        %v1738 = vrot.slane %v1687, %v1737
        %v1739 = vlaneseq
        %v1740 = vshrl.u32 %v1739, 7
        %v1741 = vsub.s32 5, %v1740
        %v1742 = vrot.slane %v1687, %v1741
        %v1743 = vlaneseq
        %v1744 = vshrl.u32 %v1743, 7
        %v1745 = vsub.s32 6, %v1744
        %v1746 = vrot.slane %v1687, %v1745
        %v1747 = vlaneseq
        %v1748 = vshrl.u32 %v1747, 7
        %v1749 = vsub.s32 7, %v1748
        %v1750 = vrot.slane %v1687, %v1749
        %v1751 = vlaneseq
        %v1752 = vshrl.u32 %v1751, 7
        %v1753 = vsub.s32 0, %v1752
        %v1754 = vrot.slane %v1689, %v1753
        %v1764 = vsel %vm521, %v1699, %v1722
        %v1765 = vsel %vm521, %v1700, %v1726
        %v1766 = vsel %vm521, %v1701, %v1730
        %v1767 = vsel %vm521, %v1702, %v1734
        %v1768 = vsel %vm521, %v1703, %v1738
        %v1769 = vsel %vm521, %v1704, %v1742
        %v1770 = vsel %vm521, %v1705, %v1746
        %v1771 = vsel %vm521, %v1706, %v1750
        %v1772 = vsel %vm521, %v1707, %v1754
        %s1773 = scalar_lea.vmem %s2, 37
        %v1774 = vld [vmem:[%s1773] ss:$4 sm:$0xff]
        %s1775 = scalar_lea.vmem %s2, 69
        %v1776 = vld [vmem:[%s1775] ss:$4 sm:$0x1]
        %s1777 = scalar_lea.vmem %s534, 37
        %v1778 = vld [vmem:[%s1777] ss:$4 sm:$0xff]
        %s1779 = scalar_lea.vmem %s534, 69
        %v1780 = vld [vmem:[%s1779] ss:$4 sm:$0x1]
        %s1781 = scalar_lea.vmem %s538, 37
        %v1782 = vld [vmem:[%s1781] ss:$4 sm:$0xff]
        %s1783 = scalar_lea.vmem %s538, 69
        %v1784 = vld [vmem:[%s1783] ss:$4 sm:$0x1]
        %v1787 = vlaneseq
        %v1788 = vshrl.u32 %v1787, 7
        %v1789 = vsub.s32 0, %v1788
        %v1790 = vrot.slane %v1774, %v1789
        %v1791 = vlaneseq
        %v1792 = vshrl.u32 %v1791, 7
        %v1793 = vsub.s32 1, %v1792
        %v1794 = vrot.slane %v1774, %v1793
        %v1795 = vlaneseq
        %v1796 = vshrl.u32 %v1795, 7
        %v1797 = vsub.s32 2, %v1796
        %v1798 = vrot.slane %v1774, %v1797
        %v1799 = vlaneseq
        %v1800 = vshrl.u32 %v1799, 7
        %v1801 = vsub.s32 3, %v1800
        %v1802 = vrot.slane %v1774, %v1801
        %v1803 = vlaneseq
        %v1804 = vshrl.u32 %v1803, 7
        %v1805 = vsub.s32 4, %v1804
        %v1806 = vrot.slane %v1774, %v1805
        %v1807 = vlaneseq
        %v1808 = vshrl.u32 %v1807, 7
        %v1809 = vsub.s32 5, %v1808
        %v1810 = vrot.slane %v1774, %v1809
        %v1811 = vlaneseq
        %v1812 = vshrl.u32 %v1811, 7
        %v1813 = vsub.s32 6, %v1812
        %v1814 = vrot.slane %v1774, %v1813
        %v1815 = vlaneseq
        %v1816 = vshrl.u32 %v1815, 7
        %v1817 = vsub.s32 7, %v1816
        %v1818 = vrot.slane %v1774, %v1817
        %v1819 = vlaneseq
        %v1820 = vshrl.u32 %v1819, 7
        %v1821 = vsub.s32 0, %v1820
        %v1822 = vrot.slane %v1776, %v1821
        %v1832 = vmul.f32 %v1668, %v1790
        %v1833 = vmul.f32 %v1669, %v1794
        %v1834 = vmul.f32 %v1670, %v1798
        %v1835 = vmul.f32 %v1671, %v1802
        %v1836 = vmul.f32 %v1672, %v1806
        %v1837 = vmul.f32 %v1673, %v1810
        %v1838 = vmul.f32 %v1674, %v1814
        %v1839 = vmul.f32 %v1675, %v1818
        %v1840 = vmul.f32 %v1676, %v1822
        %v1841 = vadd.f32 %v1659, %v1832
        %v1842 = vadd.f32 %v1660, %v1833
        %v1843 = vadd.f32 %v1661, %v1834
        %v1844 = vadd.f32 %v1662, %v1835
        %v1845 = vadd.f32 %v1663, %v1836
        %v1846 = vadd.f32 %v1664, %v1837
        %v1847 = vadd.f32 %v1665, %v1838
        %v1848 = vadd.f32 %v1666, %v1839
        %v1849 = vadd.f32 %v1667, %v1840
        %v1852 = vlaneseq
        %v1853 = vshrl.u32 %v1852, 7
        %v1854 = vsub.s32 0, %v1853
        %v1855 = vrot.slane %v1778, %v1854
        %v1856 = vlaneseq
        %v1857 = vshrl.u32 %v1856, 7
        %v1858 = vsub.s32 1, %v1857
        %v1859 = vrot.slane %v1778, %v1858
        %v1860 = vlaneseq
        %v1861 = vshrl.u32 %v1860, 7
        %v1862 = vsub.s32 2, %v1861
        %v1863 = vrot.slane %v1778, %v1862
        %v1864 = vlaneseq
        %v1865 = vshrl.u32 %v1864, 7
        %v1866 = vsub.s32 3, %v1865
        %v1867 = vrot.slane %v1778, %v1866
        %v1868 = vlaneseq
        %v1869 = vshrl.u32 %v1868, 7
        %v1870 = vsub.s32 4, %v1869
        %v1871 = vrot.slane %v1778, %v1870
        %v1872 = vlaneseq
        %v1873 = vshrl.u32 %v1872, 7
        %v1874 = vsub.s32 5, %v1873
        %v1875 = vrot.slane %v1778, %v1874
        %v1876 = vlaneseq
        %v1877 = vshrl.u32 %v1876, 7
        %v1878 = vsub.s32 6, %v1877
        %v1879 = vrot.slane %v1778, %v1878
        %v1880 = vlaneseq
        %v1881 = vshrl.u32 %v1880, 7
        %v1882 = vsub.s32 7, %v1881
        %v1883 = vrot.slane %v1778, %v1882
        %v1884 = vlaneseq
        %v1885 = vshrl.u32 %v1884, 7
        %v1886 = vsub.s32 0, %v1885
        %v1887 = vrot.slane %v1780, %v1886
        %v1897 = vmul.f32 %v1677, %v1855
        %v1898 = vmul.f32 %v1678, %v1859
        %v1899 = vmul.f32 %v1679, %v1863
        %v1900 = vmul.f32 %v1680, %v1867
        %v1901 = vmul.f32 %v1681, %v1871
        %v1902 = vmul.f32 %v1682, %v1875
        %v1903 = vmul.f32 %v1683, %v1879
        %v1904 = vmul.f32 %v1684, %v1883
        %v1905 = vmul.f32 %v1685, %v1887
        %v1906 = vadd.f32 %v1841, %v1897
        %v1907 = vadd.f32 %v1842, %v1898
        %v1908 = vadd.f32 %v1843, %v1899
        %v1909 = vadd.f32 %v1844, %v1900
        %v1910 = vadd.f32 %v1845, %v1901
        %v1911 = vadd.f32 %v1846, %v1902
        %v1912 = vadd.f32 %v1847, %v1903
        %v1913 = vadd.f32 %v1848, %v1904
        %v1914 = vadd.f32 %v1849, %v1905
        %v1917 = vlaneseq
        %v1918 = vshrl.u32 %v1917, 7
        %v1919 = vsub.s32 0, %v1918
        %v1920 = vrot.slane %v1782, %v1919
        %v1921 = vlaneseq
        %v1922 = vshrl.u32 %v1921, 7
        %v1923 = vsub.s32 1, %v1922
        %v1924 = vrot.slane %v1782, %v1923
        %v1925 = vlaneseq
        %v1926 = vshrl.u32 %v1925, 7
        %v1927 = vsub.s32 2, %v1926
        %v1928 = vrot.slane %v1782, %v1927
        %v1929 = vlaneseq
        %v1930 = vshrl.u32 %v1929, 7
        %v1931 = vsub.s32 3, %v1930
        %v1932 = vrot.slane %v1782, %v1931
        %v1933 = vlaneseq
        %v1934 = vshrl.u32 %v1933, 7
        %v1935 = vsub.s32 4, %v1934
        %v1936 = vrot.slane %v1782, %v1935
        %v1937 = vlaneseq
        %v1938 = vshrl.u32 %v1937, 7
        %v1939 = vsub.s32 5, %v1938
        %v1940 = vrot.slane %v1782, %v1939
        %v1941 = vlaneseq
        %v1942 = vshrl.u32 %v1941, 7
        %v1943 = vsub.s32 6, %v1942
        %v1944 = vrot.slane %v1782, %v1943
        %v1945 = vlaneseq
        %v1946 = vshrl.u32 %v1945, 7
        %v1947 = vsub.s32 7, %v1946
        %v1948 = vrot.slane %v1782, %v1947
        %v1949 = vlaneseq
        %v1950 = vshrl.u32 %v1949, 7
        %v1951 = vsub.s32 0, %v1950
        %v1952 = vrot.slane %v1784, %v1951
        %v1962 = vmul.f32 %v1764, %v1920
        %v1963 = vmul.f32 %v1765, %v1924
        %v1964 = vmul.f32 %v1766, %v1928
        %v1965 = vmul.f32 %v1767, %v1932
        %v1966 = vmul.f32 %v1768, %v1936
        %v1967 = vmul.f32 %v1769, %v1940
        %v1968 = vmul.f32 %v1770, %v1944
        %v1969 = vmul.f32 %v1771, %v1948
        %v1970 = vmul.f32 %v1772, %v1952
        %v1971 = vadd.f32 %v1906, %v1962
        %v1972 = vadd.f32 %v1907, %v1963
        %v1973 = vadd.f32 %v1908, %v1964
        %v1974 = vadd.f32 %v1909, %v1965
        %v1975 = vadd.f32 %v1910, %v1966
        %v1976 = vadd.f32 %v1911, %v1967
        %v1977 = vadd.f32 %v1912, %v1968
        %v1978 = vadd.f32 %v1913, %v1969
        %v1979 = vadd.f32 %v1914, %v1970
        %v1980 = vld [vmem:[%s1042 + $0x48] sm:$0xff]
        %v1981 = vld [vmem:[%s1042 + $0x50] sm:$0xff]
        %v1982 = vld [vmem:[%s1042 + $0x58] sm:$0xff]
        %v1983 = vld [vmem:[%s1042 + $0x60] sm:$0xff]
        %v1984 = vld [vmem:[%s1042 + $0x68] sm:$0xff]
        %v1985 = vld [vmem:[%s1042 + $0x70] sm:$0xff]
        %v1986 = vld [vmem:[%s1042 + $0x78] sm:$0xff]
        %v1987 = vld [vmem:[%s1042 + $0x80] sm:$0xff]
        %v1988 = vld [vmem:[%s1042 + $0x88] sm:$0xff]
        %v1989 = vld [vmem:[%s1052 + $0x48] sm:$0xff]
        %v1990 = vld [vmem:[%s1052 + $0x50] sm:$0xff]
        %v1991 = vld [vmem:[%s1052 + $0x58] sm:$0xff]
        %v1992 = vld [vmem:[%s1052 + $0x60] sm:$0xff]
        %v1993 = vld [vmem:[%s1052 + $0x68] sm:$0xff]
        %v1994 = vld [vmem:[%s1052 + $0x70] sm:$0xff]
        %v1995 = vld [vmem:[%s1052 + $0x78] sm:$0xff]
        %v1996 = vld [vmem:[%s1052 + $0x80] sm:$0xff]
        %v1997 = vld [vmem:[%s1052 + $0x88] sm:$0xff]
        %s1998 = scalar_lea.vmem %s419, 38
        %v1999 = vld [vmem:[%s1998] ss:$4 sm:$0xff]
        %s2000 = scalar_lea.vmem %s419, 70
        %v2001 = vld [vmem:[%s2000] ss:$4 sm:$0x1]
        %v2011 = vrot.slane %v1980, 1
        %v2012 = vrot.slane %v1981, 1
        %v2013 = vrot.slane %v1982, 1
        %v2014 = vrot.slane %v1983, 1
        %v2015 = vrot.slane %v1984, 1
        %v2016 = vrot.slane %v1985, 1
        %v2017 = vrot.slane %v1986, 1
        %v2018 = vrot.slane %v1987, 1
        %v2019 = vrot.slane %v1988, 1
        %v2031 = vlaneseq
        %v2032 = vshrl.u32 %v2031, 7
        %v2033 = vsub.s32 0, %v2032
        %v2034 = vrot.slane %v1999, %v2033
        %v2035 = vlaneseq
        %v2036 = vshrl.u32 %v2035, 7
        %v2037 = vsub.s32 1, %v2036
        %v2038 = vrot.slane %v1999, %v2037
        %v2039 = vlaneseq
        %v2040 = vshrl.u32 %v2039, 7
        %v2041 = vsub.s32 2, %v2040
        %v2042 = vrot.slane %v1999, %v2041
        %v2043 = vlaneseq
        %v2044 = vshrl.u32 %v2043, 7
        %v2045 = vsub.s32 3, %v2044
        %v2046 = vrot.slane %v1999, %v2045
        %v2047 = vlaneseq
        %v2048 = vshrl.u32 %v2047, 7
        %v2049 = vsub.s32 4, %v2048
        %v2050 = vrot.slane %v1999, %v2049
        %v2051 = vlaneseq
        %v2052 = vshrl.u32 %v2051, 7
        %v2053 = vsub.s32 5, %v2052
        %v2054 = vrot.slane %v1999, %v2053
        %v2055 = vlaneseq
        %v2056 = vshrl.u32 %v2055, 7
        %v2057 = vsub.s32 6, %v2056
        %v2058 = vrot.slane %v1999, %v2057
        %v2059 = vlaneseq
        %v2060 = vshrl.u32 %v2059, 7
        %v2061 = vsub.s32 7, %v2060
        %v2062 = vrot.slane %v1999, %v2061
        %v2063 = vlaneseq
        %v2064 = vshrl.u32 %v2063, 7
        %v2065 = vsub.s32 0, %v2064
        %v2066 = vrot.slane %v2001, %v2065
        %v2076 = vsel %vm521, %v2011, %v2034
        %v2077 = vsel %vm521, %v2012, %v2038
        %v2078 = vsel %vm521, %v2013, %v2042
        %v2079 = vsel %vm521, %v2014, %v2046
        %v2080 = vsel %vm521, %v2015, %v2050
        %v2081 = vsel %vm521, %v2016, %v2054
        %v2082 = vsel %vm521, %v2017, %v2058
        %v2083 = vsel %vm521, %v2018, %v2062
        %v2084 = vsel %vm521, %v2019, %v2066
        %s2085 = scalar_lea.vmem %s2, 38
        %v2086 = vld [vmem:[%s2085] ss:$4 sm:$0xff]
        %s2087 = scalar_lea.vmem %s2, 70
        %v2088 = vld [vmem:[%s2087] ss:$4 sm:$0x1]
        %s2089 = scalar_lea.vmem %s534, 38
        %v2090 = vld [vmem:[%s2089] ss:$4 sm:$0xff]
        %s2091 = scalar_lea.vmem %s534, 70
        %v2092 = vld [vmem:[%s2091] ss:$4 sm:$0x1]
        %s2093 = scalar_lea.vmem %s538, 38
        %v2094 = vld [vmem:[%s2093] ss:$4 sm:$0xff]
        %s2095 = scalar_lea.vmem %s538, 70
        %v2096 = vld [vmem:[%s2095] ss:$4 sm:$0x1]
        %v2099 = vlaneseq
        %v2100 = vshrl.u32 %v2099, 7
        %v2101 = vsub.s32 0, %v2100
        %v2102 = vrot.slane %v2086, %v2101
        %v2103 = vlaneseq
        %v2104 = vshrl.u32 %v2103, 7
        %v2105 = vsub.s32 1, %v2104
        %v2106 = vrot.slane %v2086, %v2105
        %v2107 = vlaneseq
        %v2108 = vshrl.u32 %v2107, 7
        %v2109 = vsub.s32 2, %v2108
        %v2110 = vrot.slane %v2086, %v2109
        %v2111 = vlaneseq
        %v2112 = vshrl.u32 %v2111, 7
        %v2113 = vsub.s32 3, %v2112
        %v2114 = vrot.slane %v2086, %v2113
        %v2115 = vlaneseq
        %v2116 = vshrl.u32 %v2115, 7
        %v2117 = vsub.s32 4, %v2116
        %v2118 = vrot.slane %v2086, %v2117
        %v2119 = vlaneseq
        %v2120 = vshrl.u32 %v2119, 7
        %v2121 = vsub.s32 5, %v2120
        %v2122 = vrot.slane %v2086, %v2121
        %v2123 = vlaneseq
        %v2124 = vshrl.u32 %v2123, 7
        %v2125 = vsub.s32 6, %v2124
        %v2126 = vrot.slane %v2086, %v2125
        %v2127 = vlaneseq
        %v2128 = vshrl.u32 %v2127, 7
        %v2129 = vsub.s32 7, %v2128
        %v2130 = vrot.slane %v2086, %v2129
        %v2131 = vlaneseq
        %v2132 = vshrl.u32 %v2131, 7
        %v2133 = vsub.s32 0, %v2132
        %v2134 = vrot.slane %v2088, %v2133
        %v2144 = vmul.f32 %v1980, %v2102
        %v2145 = vmul.f32 %v1981, %v2106
        %v2146 = vmul.f32 %v1982, %v2110
        %v2147 = vmul.f32 %v1983, %v2114
        %v2148 = vmul.f32 %v1984, %v2118
        %v2149 = vmul.f32 %v1985, %v2122
        %v2150 = vmul.f32 %v1986, %v2126
        %v2151 = vmul.f32 %v1987, %v2130
        %v2152 = vmul.f32 %v1988, %v2134
        %v2153 = vadd.f32 %v1971, %v2144
        %v2154 = vadd.f32 %v1972, %v2145
        %v2155 = vadd.f32 %v1973, %v2146
        %v2156 = vadd.f32 %v1974, %v2147
        %v2157 = vadd.f32 %v1975, %v2148
        %v2158 = vadd.f32 %v1976, %v2149
        %v2159 = vadd.f32 %v1977, %v2150
        %v2160 = vadd.f32 %v1978, %v2151
        %v2161 = vadd.f32 %v1979, %v2152
        %v2164 = vlaneseq
        %v2165 = vshrl.u32 %v2164, 7
        %v2166 = vsub.s32 0, %v2165
        %v2167 = vrot.slane %v2090, %v2166
        %v2168 = vlaneseq
        %v2169 = vshrl.u32 %v2168, 7
        %v2170 = vsub.s32 1, %v2169
        %v2171 = vrot.slane %v2090, %v2170
        %v2172 = vlaneseq
        %v2173 = vshrl.u32 %v2172, 7
        %v2174 = vsub.s32 2, %v2173
        %v2175 = vrot.slane %v2090, %v2174
        %v2176 = vlaneseq
        %v2177 = vshrl.u32 %v2176, 7
        %v2178 = vsub.s32 3, %v2177
        %v2179 = vrot.slane %v2090, %v2178
        %v2180 = vlaneseq
        %v2181 = vshrl.u32 %v2180, 7
        %v2182 = vsub.s32 4, %v2181
        %v2183 = vrot.slane %v2090, %v2182
        %v2184 = vlaneseq
        %v2185 = vshrl.u32 %v2184, 7
        %v2186 = vsub.s32 5, %v2185
        %v2187 = vrot.slane %v2090, %v2186
        %v2188 = vlaneseq
        %v2189 = vshrl.u32 %v2188, 7
        %v2190 = vsub.s32 6, %v2189
        %v2191 = vrot.slane %v2090, %v2190
        %v2192 = vlaneseq
        %v2193 = vshrl.u32 %v2192, 7
        %v2194 = vsub.s32 7, %v2193
        %v2195 = vrot.slane %v2090, %v2194
        %v2196 = vlaneseq
        %v2197 = vshrl.u32 %v2196, 7
        %v2198 = vsub.s32 0, %v2197
        %v2199 = vrot.slane %v2092, %v2198
        %v2209 = vmul.f32 %v1989, %v2167
        %v2210 = vmul.f32 %v1990, %v2171
        %v2211 = vmul.f32 %v1991, %v2175
        %v2212 = vmul.f32 %v1992, %v2179
        %v2213 = vmul.f32 %v1993, %v2183
        %v2214 = vmul.f32 %v1994, %v2187
        %v2215 = vmul.f32 %v1995, %v2191
        %v2216 = vmul.f32 %v1996, %v2195
        %v2217 = vmul.f32 %v1997, %v2199
        %v2218 = vadd.f32 %v2153, %v2209
        %v2219 = vadd.f32 %v2154, %v2210
        %v2220 = vadd.f32 %v2155, %v2211
        %v2221 = vadd.f32 %v2156, %v2212
        %v2222 = vadd.f32 %v2157, %v2213
        %v2223 = vadd.f32 %v2158, %v2214
        %v2224 = vadd.f32 %v2159, %v2215
        %v2225 = vadd.f32 %v2160, %v2216
        %v2226 = vadd.f32 %v2161, %v2217
        %v2229 = vlaneseq
        %v2230 = vshrl.u32 %v2229, 7
        %v2231 = vsub.s32 0, %v2230
        %v2232 = vrot.slane %v2094, %v2231
        %v2233 = vlaneseq
        %v2234 = vshrl.u32 %v2233, 7
        %v2235 = vsub.s32 1, %v2234
        %v2236 = vrot.slane %v2094, %v2235
        %v2237 = vlaneseq
        %v2238 = vshrl.u32 %v2237, 7
        %v2239 = vsub.s32 2, %v2238
        %v2240 = vrot.slane %v2094, %v2239
        %v2241 = vlaneseq
        %v2242 = vshrl.u32 %v2241, 7
        %v2243 = vsub.s32 3, %v2242
        %v2244 = vrot.slane %v2094, %v2243
        %v2245 = vlaneseq
        %v2246 = vshrl.u32 %v2245, 7
        %v2247 = vsub.s32 4, %v2246
        %v2248 = vrot.slane %v2094, %v2247
        %v2249 = vlaneseq
        %v2250 = vshrl.u32 %v2249, 7
        %v2251 = vsub.s32 5, %v2250
        %v2252 = vrot.slane %v2094, %v2251
        %v2253 = vlaneseq
        %v2254 = vshrl.u32 %v2253, 7
        %v2255 = vsub.s32 6, %v2254
        %v2256 = vrot.slane %v2094, %v2255
        %v2257 = vlaneseq
        %v2258 = vshrl.u32 %v2257, 7
        %v2259 = vsub.s32 7, %v2258
        %v2260 = vrot.slane %v2094, %v2259
        %v2261 = vlaneseq
        %v2262 = vshrl.u32 %v2261, 7
        %v2263 = vsub.s32 0, %v2262
        %v2264 = vrot.slane %v2096, %v2263
        %v2274 = vmul.f32 %v2076, %v2232
        %v2275 = vmul.f32 %v2077, %v2236
        %v2276 = vmul.f32 %v2078, %v2240
        %v2277 = vmul.f32 %v2079, %v2244
        %v2278 = vmul.f32 %v2080, %v2248
        %v2279 = vmul.f32 %v2081, %v2252
        %v2280 = vmul.f32 %v2082, %v2256
        %v2281 = vmul.f32 %v2083, %v2260
        %v2282 = vmul.f32 %v2084, %v2264
        %v2283 = vadd.f32 %v2218, %v2274
        %v2284 = vadd.f32 %v2219, %v2275
        %v2285 = vadd.f32 %v2220, %v2276
        %v2286 = vadd.f32 %v2221, %v2277
        %v2287 = vadd.f32 %v2222, %v2278
        %v2288 = vadd.f32 %v2223, %v2279
        %v2289 = vadd.f32 %v2224, %v2280
        %v2290 = vadd.f32 %v2225, %v2281
        %v2291 = vadd.f32 %v2226, %v2282
        %2292 = vst [vmem:[%s424 + $0x48] sm:$0xff] %v2283
        %2293 = vst [vmem:[%s424 + $0x50] sm:$0xff] %v2284
        %2294 = vst [vmem:[%s424 + $0x58] sm:$0xff] %v2285
        %2295 = vst [vmem:[%s424 + $0x60] sm:$0xff] %v2286
        %2296 = vst [vmem:[%s424 + $0x68] sm:$0xff] %v2287
        %2297 = vst [vmem:[%s424 + $0x70] sm:$0xff] %v2288
        %2298 = vst [vmem:[%s424 + $0x78] sm:$0xff] %v2289
        %2299 = vst [vmem:[%s424 + $0x80] sm:$0xff] %v2290
        %2300 = vst [vmem:[%s424 + $0x88] sm:$0xff] %v2291
        %p2301 = scmp.lt.s32.totalorder %s14, 1
        %s2302 = scalar_select %p2301, %s14, 1
        %s2303 = smul.addr %s2302, 18
        %s2304 = smul.addr %s2303, 8
        %s2305 = scalar_lea.vmem %s3, %s2304
        // Predicated region
        $region56: #{depthwise_conv2d_s2.1} parent=50 // pred_check
          %p2306 = pneg %p105
        $region57: #{depthwise_conv2d_s2.1} parent=50 // pred_check_branch
          %2308 = sbr.rel (%p2306) target = $region59
        $region58: #{depthwise_conv2d_s2.1} parent=50 // pred_region
          _
        $region59: #{depthwise_conv2d_s2.1} parent=50 // pred_fallthru
          _
      $region51: #{depthwise_conv2d_s2.1} parent=5 // pred_fallthru
        _
      %p2309 = scmp.le.s32.totalorder 2, %s9
      // Predicated region
      $region60: #{depthwise_conv2d_s2.1} parent=5 // pred_check
        %p2310 = pneg %p2309
      $region61: #{depthwise_conv2d_s2.1} parent=5 // pred_check_branch
        %2312 = sbr.rel (%p2310) target = $region63
      $region62: #{depthwise_conv2d_s2.1} parent=5 // pred_region
        %s2313 = ssub.s32 %s9, 2
        // Predicated region
        $region64: #{depthwise_conv2d_s2.1} parent=62 // pred_check
          %p2314 = pneg %p111
        $region65: #{depthwise_conv2d_s2.1} parent=62 // pred_check_branch
          %2316 = sbr.rel (%p2314) target = $region67
        $region66: #{depthwise_conv2d_s2.1} parent=62 // pred_region
          %p2317 = scmp.lt.s32.totalorder %s15, 1
          %s2318 = scalar_select %p2317, %s15, 1
          %s2319 = smul.addr %s2318, 18
          %s2320 = smul.addr %s2319, 8
          %s2321 = scalar_lea.vmem %s3, %s2320
        $region67: #{depthwise_conv2d_s2.1} parent=62 // pred_fallthru
          _
      $region63: #{depthwise_conv2d_s2.1} parent=5 // pred_fallthru
        _
    $region6: #{depthwise_conv2d_s2.1} parent=1 // loop_footer
      %s13 = sadd.s32 1, %s9
    $region7: #{depthwise_conv2d_s2.1} parent=1 // loop_footer_branch
      %8 = sbr.rel target = $region3
    $region8: #{depthwise_conv2d_s2.1} parent=1 // loop_exit
      _

</llo_original>
